<compile_context>
chip_gen: v6e
topology: v6e:2x2x1
jax: 0.10.0
libtpu: 0.0.40
codegen_flags: <defaults>
</compile_context>

<pallas_src>
import jax
import jax.numpy as jnp
from jax.experimental import pallas as pl
from jax.experimental.pallas import tpu as pltpu


def _round_up(n, m):
    return ((n + m - 1) // m) * m


def vae_kernel(x_ref, eps_ref,
               w1_ref, b1_ref,
               wh_ref, bh_ref,
               w3_ref, b3_ref,
               w4_ref, b4_ref,
               recon_ref, heads_ref):
    d_lat = wh_ref.shape[1] // 2  # padded latent width (128)

    x = x_ref[...]  # bf16 (TB, D_in_pad)

    # encode: h1 = relu(x @ W1 + b1)   (bf16 MXU operands, f32 accumulate)
    h1 = jnp.dot(x, w1_ref[...], preferred_element_type=jnp.float32) + b1_ref[...]
    h1 = jnp.maximum(h1, 0.0)

    # fused mu/logvar heads: one lane-dense matmul, then 128-aligned halves.
    heads = jnp.dot(h1.astype(jnp.bfloat16), wh_ref[...],
                    preferred_element_type=jnp.float32) + bh_ref[...]
    mu = heads[:, :d_lat]
    logvar = heads[:, d_lat:]

    # reparameterize: z = mu + eps * exp(0.5 * logvar)   (f32 elementwise)
    std = jnp.exp(0.5 * logvar)
    z = mu + eps_ref[...].astype(jnp.float32) * std

    # decode: recon = relu(z @ W3 + b3) @ W4 + b4
    h3 = jnp.dot(z.astype(jnp.bfloat16), w3_ref[...],
                 preferred_element_type=jnp.float32) + b3_ref[...]
    h3 = jnp.maximum(h3, 0.0)
    recon = jnp.dot(h3.astype(jnp.bfloat16), w4_ref[...],
                    preferred_element_type=jnp.float32) + b4_ref[...]

    recon_ref[...] = recon
    heads_ref[...] = heads  # mu | logvar (padded); sliced apart in the wrapper


def prepare_vae_params(params, input_dim=364, hidden_dim=512, latent_dim=30):
    """One-time prep: pad to lane-aligned dims and cast matmul operands to bf16.

    Run this ONCE (outside the per-step forward path); its ~10 XLA ops and
    ~1.2 MB of padded weights would otherwise re-run on every forward call.
    Zero padding keeps padded mu/logvar/z/recon columns exactly 0.
    """
    f32, bf16 = jnp.float32, jnp.bfloat16
    d_in = _round_up(input_dim, 128)    # 364 -> 384
    d_lat = _round_up(latent_dim, 128)  # 30  -> 128

    w1 = jnp.zeros((d_in, hidden_dim), f32).at[:input_dim].set(params["w1"]).astype(bf16)
    b1 = params["b1"].astype(f32)

    w_heads = jnp.zeros((hidden_dim, 2 * d_lat), f32)
    w_heads = w_heads.at[:, :latent_dim].set(params["w21"])
    w_heads = w_heads.at[:, d_lat:d_lat + latent_dim].set(params["w22"])
    w_heads = w_heads.astype(bf16)
    b_heads = jnp.zeros((1, 2 * d_lat), f32)
    b_heads = b_heads.at[:, :latent_dim].set(params["b21"])
    b_heads = b_heads.at[:, d_lat:d_lat + latent_dim].set(params["b22"])

    w3 = jnp.zeros((d_lat, hidden_dim), f32).at[:latent_dim].set(params["w3"]).astype(bf16)
    b3 = params["b3"].astype(f32)

    w4 = jnp.zeros((hidden_dim, d_in), f32).at[:, :input_dim].set(params["w4"]).astype(bf16)
    b4 = jnp.zeros((1, d_in), f32).at[:, :input_dim].set(params["b4"])

    return dict(w1=w1, b1=b1, w_heads=w_heads, b_heads=b_heads,
                w3=w3, b3=b3, w4=w4, b4=b4)


def vae_forward(x, eps, prepped):
    """Full VAE forward in one pallas_call.

    Args:
      x:       [B, input_dim] float32
      eps:     [B, latent_dim] float32 standard-normal noise
      prepped: output of prepare_vae_params (padded bf16 weights, f32 biases)
    Returns:
      (recon [B, input_dim], mu [B, latent], logvar [B, latent], z [B, latent])
    """
    B, input_dim = x.shape
    latent_dim = eps.shape[1]
    d_in, hidden_dim = prepped["w1"].shape
    d_lat = prepped["w3"].shape[0]

    # Batch tile: large enough to amortize ~0.35 us/step pipeline overhead, but
    # split into >=2 grid steps for mid/large batches so v7x's 2 TensorCores
    # both get work (batch axis is "parallel").
    tb = min(1024, _round_up(max((B + 1) // 2, 8), 16))
    b_pad = _round_up(B, tb)
    grid = (b_pad // tb,)

    f32, bf16 = jnp.float32, jnp.bfloat16

    # Pad activations / noise (zero-fill keeps padded columns exactly 0).
    x_pad = jnp.zeros((b_pad, d_in), f32).at[:B, :input_dim].set(x).astype(bf16)
    eps_pad = jnp.zeros((b_pad, d_lat), f32).at[:B, :latent_dim].set(eps).astype(bf16)

    batch_map = lambda i: (i, 0)   # batch-tiled operands
    fixed_map = lambda i: (0, 0)   # weights/biases stay VMEM-resident across tiles

    in_specs = [
        pl.BlockSpec((tb, d_in), batch_map),               # x (bf16)
        pl.BlockSpec((tb, d_lat), batch_map),              # eps (bf16)
        pl.BlockSpec((d_in, hidden_dim), fixed_map),       # w1
        pl.BlockSpec((1, hidden_dim), fixed_map),          # b1
        pl.BlockSpec((hidden_dim, 2 * d_lat), fixed_map),  # w_heads
        pl.BlockSpec((1, 2 * d_lat), fixed_map),           # b_heads
        pl.BlockSpec((d_lat, hidden_dim), fixed_map),      # w3
        pl.BlockSpec((1, hidden_dim), fixed_map),          # b3
        pl.BlockSpec((hidden_dim, d_in), fixed_map),       # w4
        pl.BlockSpec((1, d_in), fixed_map),                # b4
    ]
    out_specs = (
        pl.BlockSpec((tb, d_in), batch_map),               # recon
        pl.BlockSpec((tb, 2 * d_lat), batch_map),          # heads = mu | logvar
    )
    out_shape = (
        jax.ShapeDtypeStruct((b_pad, d_in), f32),
        jax.ShapeDtypeStruct((b_pad, 2 * d_lat), f32),
    )

    # Advisory cost hint for XLA's scheduler around the custom call.
    flops = 2 * b_pad * hidden_dim * (d_in + 2 * d_lat + d_lat + d_in)
    weight_bytes = sum(prepped[k].size * prepped[k].dtype.itemsize
                       for k in ("w1", "b1", "w_heads", "b_heads",
                                 "w3", "b3", "w4", "b4"))
    bytes_accessed = ((x_pad.size + eps_pad.size) * 2        # bf16 inputs
                      + weight_bytes
                      + b_pad * (d_in + 2 * d_lat) * 4)      # f32 outputs
    cost = pl.CostEstimate(flops=flops,
                           transcendentals=b_pad * d_lat,
                           bytes_accessed=bytes_accessed)

    recon_p, heads_p = pl.pallas_call(
        vae_kernel,
        out_shape=out_shape,
        grid=grid,
        in_specs=in_specs,
        out_specs=out_specs,
        compiler_params=pltpu.CompilerParams(
            dimension_semantics=("parallel",),
            vmem_limit_bytes=32 << 20,
        ),
        cost_estimate=cost,
    )(x_pad, eps_pad,
      prepped["w1"], prepped["b1"],
      prepped["w_heads"], prepped["b_heads"],
      prepped["w3"], prepped["b3"],
      prepped["w4"], prepped["b4"])

    recon = recon_p[:B, :input_dim]
    mu = heads_p[:B, :latent_dim]
    logvar = heads_p[:B, d_lat:d_lat + latent_dim]
    # z dropped from kernel outputs (writeback was the dominant HBM stream);
    # recompute it here on the small unpadded slices in f32.
    z = mu + eps * jnp.exp(0.5 * logvar)
    return recon, mu, logvar, z


def init_params(key, input_dim=364, hidden_dim=512, latent_dim=30):
    """Deterministic synthetic init; weights stored [in, out], biases [1, out]."""
    ks = jax.random.split(key, 10)

    def lin(kw, kb, fan_in, fan_out):
        scale = 1.0 / jnp.sqrt(fan_in)
        w = jax.random.uniform(kw, (fan_in, fan_out), jnp.float32, -scale, scale)
        b = jax.random.uniform(kb, (1, fan_out), jnp.float32, -scale, scale)
        return w, b

    w1, b1 = lin(ks[0], ks[1], input_dim, hidden_dim)
    w21, b21 = lin(ks[2], ks[3], hidden_dim, latent_dim)
    w22, b22 = lin(ks[4], ks[5], hidden_dim, latent_dim)
    w3, b3 = lin(ks[6], ks[7], latent_dim, hidden_dim)
    w4, b4 = lin(ks[8], ks[9], hidden_dim, input_dim)
    return dict(w1=w1, b1=b1, w21=w21, b21=b21, w22=w22, b22=b22,
                w3=w3, b3=b3, w4=w4, b4=b4)


def vae_reference(x, eps, params):
    """Pure-JAX f32 reference of the PyTorch forward (sample=True)."""
    h1 = jnp.maximum(x @ params["w1"] + params["b1"], 0.0)
    mu = h1 @ params["w21"] + params["b21"]
    logvar = h1 @ params["w22"] + params["b22"]
    z = mu + eps * jnp.exp(0.5 * logvar)
    h3 = jnp.maximum(z @ params["w3"] + params["b3"], 0.0)
    recon = h3 @ params["w4"] + params["b4"]
    return recon, mu, logvar, z


if __name__ == "__main__":
    input_dim, hidden_dim, latent_dim, batch = 364, 512, 30, 8

    key = jax.random.PRNGKey(0)
    k_params, k_x, k_eps = jax.random.split(key, 3)

    params = init_params(k_params, input_dim, hidden_dim, latent_dim)
    x = jax.random.normal(k_x, (batch, input_dim), jnp.float32)
    eps = jax.random.normal(k_eps, (batch, latent_dim), jnp.float32)

    # One-time weight prep, hoisted out of the per-step forward path.
    prepped = prepare_vae_params(params, input_dim, hidden_dim, latent_dim)
    prepped = jax.tree_util.tree_map(lambda a: a.block_until_ready(), prepped)

    fwd = jax.jit(vae_forward)
    recon, mu, logvar, z = fwd(x, eps, prepped)
    jax.block_until_ready((recon, mu, logvar, z))

    # Correctness check against pure-JAX f32 reference (kernel uses bf16 matmul
    # operands / bf16 eps with f32 accumulation, so tolerances are loosened).
    r_ref, mu_ref, lv_ref, z_ref = vae_reference(x, eps, params)
    assert recon.shape == r_ref.shape and mu.shape == mu_ref.shape
    assert jnp.allclose(mu, mu_ref, atol=2e-2, rtol=2e-2)
    assert jnp.allclose(logvar, lv_ref, atol=2e-2, rtol=2e-2)
    assert jnp.allclose(z, z_ref, atol=2e-2, rtol=2e-2)
    assert jnp.allclose(recon, r_ref, atol=5e-2, rtol=5e-2)

    print("KERNEL_OK")
</pallas_src>

<mosaic_0001>
module attributes {stable_mosaic.version = 11 : i64} {
  func.func @vae_kernel(%arg0: i32, %arg1: memref<16x384xbf16, #tpu.memory_space<vmem>>, %arg2: memref<16x128xbf16, #tpu.memory_space<vmem>>, %arg3: memref<384x512xbf16, #tpu.memory_space<vmem>>, %arg4: memref<1x512xf32, #tpu.memory_space<vmem>>, %arg5: memref<512x256xbf16, #tpu.memory_space<vmem>>, %arg6: memref<1x256xf32, #tpu.memory_space<vmem>>, %arg7: memref<128x512xbf16, #tpu.memory_space<vmem>>, %arg8: memref<1x512xf32, #tpu.memory_space<vmem>>, %arg9: memref<512x384xbf16, #tpu.memory_space<vmem>>, %arg10: memref<1x384xf32, #tpu.memory_space<vmem>>, %arg11: memref<16x384xf32, #tpu.memory_space<vmem>>, %arg12: memref<16x256xf32, #tpu.memory_space<vmem>>) attributes {dimension_semantics = [#tpu.dimension_semantics<parallel>], iteration_bounds = array<i64: 1>, scalar_prefetch = 0 : i64, scratch_operands = 0 : i64, tpu.core_type = #tpu.core_type<tc>, window_params = [{transform_indices = @transform_0, window_bounds = array<i64: 16, 384>}, {transform_indices = @transform_1, window_bounds = array<i64: 16, 128>}, {pipeline_mode = #tpu.pipeline_mode<synchronous>, transform_indices = @transform_2, window_bounds = array<i64: 384, 512>}, {pipeline_mode = #tpu.pipeline_mode<synchronous>, transform_indices = @transform_3, window_bounds = array<i64: 1, 512>}, {pipeline_mode = #tpu.pipeline_mode<synchronous>, transform_indices = @transform_4, window_bounds = array<i64: 512, 256>}, {pipeline_mode = #tpu.pipeline_mode<synchronous>, transform_indices = @transform_5, window_bounds = array<i64: 1, 256>}, {pipeline_mode = #tpu.pipeline_mode<synchronous>, transform_indices = @transform_6, window_bounds = array<i64: 128, 512>}, {pipeline_mode = #tpu.pipeline_mode<synchronous>, transform_indices = @transform_7, window_bounds = array<i64: 1, 512>}, {pipeline_mode = #tpu.pipeline_mode<synchronous>, transform_indices = @transform_8, window_bounds = array<i64: 512, 384>}, {pipeline_mode = #tpu.pipeline_mode<synchronous>, transform_indices = @transform_9, window_bounds = array<i64: 1, 384>}, {transform_indices = @transform_10, window_bounds = array<i64: 16, 384>}, {transform_indices = @transform_11, window_bounds = array<i64: 16, 256>}]} {
    %c0 = arith.constant 0 : index
    %c0_0 = arith.constant 0 : index
    %0 = vector.load %arg1[%c0, %c0_0] : memref<16x384xbf16, #tpu.memory_space<vmem>>, vector<16x384xbf16>
    %c0_1 = arith.constant 0 : index
    %c0_2 = arith.constant 0 : index
    %1 = vector.load %arg3[%c0_1, %c0_2] : memref<384x512xbf16, #tpu.memory_space<vmem>>, vector<384x512xbf16>
    %cst = arith.constant dense<0.000000e+00> : vector<16x512xf32>
    %2 = tpu.matmul %0, %1, %cst {dimension_numbers = #tpu.dot_dimension_numbers<[1], [0], [0], [1], [0, 0, 1, 1], [], []>} : vector<16x384xbf16>, vector<384x512xbf16>, vector<16x512xf32> -> vector<16x512xf32>
    %c0_3 = arith.constant 0 : index
    %c0_4 = arith.constant 0 : index
    %3 = vector.load %arg4[%c0_3, %c0_4] : memref<1x512xf32, #tpu.memory_space<vmem>>, vector<1x512xf32>
    %4 = vector.broadcast %3 : vector<1x512xf32> to vector<16x512xf32>
    %5 = arith.addf %2, %4 : vector<16x512xf32>
    %cst_5 = arith.constant 0.000000e+00 : f32
    %6 = vector.broadcast %cst_5 : f32 to vector<16x512xf32>
    %7 = arith.maximumf %5, %6 : vector<16x512xf32>
    %8 = arith.truncf %7 : vector<16x512xf32> to vector<16x512xbf16>
    %c0_6 = arith.constant 0 : index
    %c0_7 = arith.constant 0 : index
    %9 = vector.load %arg5[%c0_6, %c0_7] : memref<512x256xbf16, #tpu.memory_space<vmem>>, vector<512x256xbf16>
    %cst_8 = arith.constant dense<0.000000e+00> : vector<16x256xf32>
    %10 = tpu.matmul %8, %9, %cst_8 {dimension_numbers = #tpu.dot_dimension_numbers<[1], [0], [0], [1], [0, 0, 1, 1], [], []>} : vector<16x512xbf16>, vector<512x256xbf16>, vector<16x256xf32> -> vector<16x256xf32>
    %c0_9 = arith.constant 0 : index
    %c0_10 = arith.constant 0 : index
    %11 = vector.load %arg6[%c0_9, %c0_10] : memref<1x256xf32, #tpu.memory_space<vmem>>, vector<1x256xf32>
    %12 = vector.broadcast %11 : vector<1x256xf32> to vector<16x256xf32>
    %13 = arith.addf %10, %12 : vector<16x256xf32>
    %14 = vector.extract_strided_slice %13 {offsets = [0, 0], sizes = [16, 128], strides = [1, 1]} : vector<16x256xf32> to vector<16x128xf32>
    %15 = vector.extract_strided_slice %13 {offsets = [0, 128], sizes = [16, 128], strides = [1, 1]} : vector<16x256xf32> to vector<16x128xf32>
    %cst_11 = arith.constant 5.000000e-01 : f32
    %16 = vector.broadcast %cst_11 : f32 to vector<16x128xf32>
    %17 = arith.mulf %16, %15 : vector<16x128xf32>
    %18 = math.exp %17 : vector<16x128xf32>
    %c0_12 = arith.constant 0 : index
    %c0_13 = arith.constant 0 : index
    %19 = vector.load %arg2[%c0_12, %c0_13] : memref<16x128xbf16, #tpu.memory_space<vmem>>, vector<16x128xbf16>
    %20 = arith.extf %19 : vector<16x128xbf16> to vector<16x128xf32>
    %21 = arith.mulf %20, %18 : vector<16x128xf32>
    %22 = arith.addf %14, %21 : vector<16x128xf32>
    %23 = arith.truncf %22 : vector<16x128xf32> to vector<16x128xbf16>
    %c0_14 = arith.constant 0 : index
    %c0_15 = arith.constant 0 : index
    %24 = vector.load %arg7[%c0_14, %c0_15] : memref<128x512xbf16, #tpu.memory_space<vmem>>, vector<128x512xbf16>
    %cst_16 = arith.constant dense<0.000000e+00> : vector<16x512xf32>
    %25 = tpu.matmul %23, %24, %cst_16 {dimension_numbers = #tpu.dot_dimension_numbers<[1], [0], [0], [1], [0, 0, 1, 1], [], []>} : vector<16x128xbf16>, vector<128x512xbf16>, vector<16x512xf32> -> vector<16x512xf32>
    %c0_17 = arith.constant 0 : index
    %c0_18 = arith.constant 0 : index
    %26 = vector.load %arg8[%c0_17, %c0_18] : memref<1x512xf32, #tpu.memory_space<vmem>>, vector<1x512xf32>
    %27 = vector.broadcast %26 : vector<1x512xf32> to vector<16x512xf32>
    %28 = arith.addf %25, %27 : vector<16x512xf32>
    %cst_19 = arith.constant 0.000000e+00 : f32
    %29 = vector.broadcast %cst_19 : f32 to vector<16x512xf32>
    %30 = arith.maximumf %28, %29 : vector<16x512xf32>
    %31 = arith.truncf %30 : vector<16x512xf32> to vector<16x512xbf16>
    %c0_20 = arith.constant 0 : index
    %c0_21 = arith.constant 0 : index
    %32 = vector.load %arg9[%c0_20, %c0_21] : memref<512x384xbf16, #tpu.memory_space<vmem>>, vector<512x384xbf16>
    %cst_22 = arith.constant dense<0.000000e+00> : vector<16x384xf32>
    %33 = tpu.matmul %31, %32, %cst_22 {dimension_numbers = #tpu.dot_dimension_numbers<[1], [0], [0], [1], [0, 0, 1, 1], [], []>} : vector<16x512xbf16>, vector<512x384xbf16>, vector<16x384xf32> -> vector<16x384xf32>
    %c0_23 = arith.constant 0 : index
    %c0_24 = arith.constant 0 : index
    %34 = vector.load %arg10[%c0_23, %c0_24] : memref<1x384xf32, #tpu.memory_space<vmem>>, vector<1x384xf32>
    %35 = vector.broadcast %34 : vector<1x384xf32> to vector<16x384xf32>
    %36 = arith.addf %33, %35 : vector<16x384xf32>
    %c0_25 = arith.constant 0 : index
    %c0_26 = arith.constant 0 : index
    %37 = vector.load %arg11[%c0_25, %c0_26] : memref<16x384xf32, #tpu.memory_space<vmem>>, vector<16x384xf32>
    tpu.vector_store %arg11[%c0_25, %c0_26], %36 {strides = array<i32>} : memref<16x384xf32, #tpu.memory_space<vmem>>, vector<16x384xf32>,
    %c0_27 = arith.constant 0 : index
    %c0_28 = arith.constant 0 : index
    %38 = vector.load %arg12[%c0_27, %c0_28] : memref<16x256xf32, #tpu.memory_space<vmem>>, vector<16x256xf32>
    tpu.vector_store %arg12[%c0_27, %c0_28], %13 {strides = array<i32>} : memref<16x256xf32, #tpu.memory_space<vmem>>, vector<16x256xf32>,
    return
  }
  func.func @transform_0(%arg0: i32) -> (i32, i32) {
    %c0_i32 = arith.constant 0 : i32
    %c0_i32_0 = arith.constant 0 : i32
    return %arg0, %c0_i32 : i32, i32
  }
  func.func @transform_1(%arg0: i32) -> (i32, i32) {
    %c0_i32 = arith.constant 0 : i32
    %c0_i32_0 = arith.constant 0 : i32
    return %arg0, %c0_i32 : i32, i32
  }
  func.func @transform_2(%arg0: i32) -> (i32, i32) {
    %c0_i32 = arith.constant 0 : i32
    %c0_i32_0 = arith.constant 0 : i32
    %c0_i32_1 = arith.constant 0 : i32
    return %c0_i32, %c0_i32_0 : i32, i32
  }
  func.func @transform_3(%arg0: i32) -> (i32, i32) {
    %c0_i32 = arith.constant 0 : i32
    %c0_i32_0 = arith.constant 0 : i32
    %c0_i32_1 = arith.constant 0 : i32
    return %c0_i32, %c0_i32_0 : i32, i32
  }
  func.func @transform_4(%arg0: i32) -> (i32, i32) {
    %c0_i32 = arith.constant 0 : i32
    %c0_i32_0 = arith.constant 0 : i32
    %c0_i32_1 = arith.constant 0 : i32
    return %c0_i32, %c0_i32_0 : i32, i32
  }
  func.func @transform_5(%arg0: i32) -> (i32, i32) {
    %c0_i32 = arith.constant 0 : i32
    %c0_i32_0 = arith.constant 0 : i32
    %c0_i32_1 = arith.constant 0 : i32
    return %c0_i32, %c0_i32_0 : i32, i32
  }
  func.func @transform_6(%arg0: i32) -> (i32, i32) {
    %c0_i32 = arith.constant 0 : i32
    %c0_i32_0 = arith.constant 0 : i32
    %c0_i32_1 = arith.constant 0 : i32
    return %c0_i32, %c0_i32_0 : i32, i32
  }
  func.func @transform_7(%arg0: i32) -> (i32, i32) {
    %c0_i32 = arith.constant 0 : i32
    %c0_i32_0 = arith.constant 0 : i32
    %c0_i32_1 = arith.constant 0 : i32
    return %c0_i32, %c0_i32_0 : i32, i32
  }
  func.func @transform_8(%arg0: i32) -> (i32, i32) {
    %c0_i32 = arith.constant 0 : i32
    %c0_i32_0 = arith.constant 0 : i32
    %c0_i32_1 = arith.constant 0 : i32
    return %c0_i32, %c0_i32_0 : i32, i32
  }
  func.func @transform_9(%arg0: i32) -> (i32, i32) {
    %c0_i32 = arith.constant 0 : i32
    %c0_i32_0 = arith.constant 0 : i32
    %c0_i32_1 = arith.constant 0 : i32
    return %c0_i32, %c0_i32_0 : i32, i32
  }
  func.func @transform_10(%arg0: i32) -> (i32, i32) {
    %c0_i32 = arith.constant 0 : i32
    %c0_i32_0 = arith.constant 0 : i32
    return %arg0, %c0_i32 : i32, i32
  }
  func.func @transform_11(%arg0: i32) -> (i32, i32) {
    %c0_i32 = arith.constant 0 : i32
    %c0_i32_0 = arith.constant 0 : i32
    return %arg0, %c0_i32 : i32, i32
  }
}

</mosaic_0001>

<llo_original>
// kernel: vae_forward.1
$region0: #{vae_forward.1}
  #allocation0 [shape = 'u32[]', space=smem, size = 0x4, offset = 0x4, fixed_abs, tag = 'smem constant byte address 0x4 - core index']
  #allocation1 [shape = 'u32[144,128]{1,0:T(1,128)}', space=vmem, size = 0x12000, scoped, tag = 'internal scratch']
  %s0 = inlined_call_operand.vmem [shape: bf16[16,384], index: 0, kind: input, shape index: {}]
  %s1 = inlined_call_operand.vmem [shape: bf16[16,128], index: 1, kind: input, shape index: {}]
  %s2 = inlined_call_operand.hbm [shape: bf16[384,512], index: 2, kind: input, shape index: {}]
  %s3 = inlined_call_operand.vmem [shape: f32[1,512], index: 3, kind: input, shape index: {}]
  %s4 = inlined_call_operand.hbm [shape: bf16[512,256], index: 4, kind: input, shape index: {}]
  %s5 = inlined_call_operand.vmem [shape: f32[1,256], index: 5, kind: input, shape index: {}]
  %s6 = inlined_call_operand.hbm [shape: bf16[128,512], index: 6, kind: input, shape index: {}]
  %s7 = inlined_call_operand.vmem [shape: f32[1,512], index: 7, kind: input, shape index: {}]
  %s8 = inlined_call_operand.hbm [shape: bf16[512,384], index: 8, kind: input, shape index: {}]
  %s9 = inlined_call_operand.vmem [shape: f32[1,384], index: 9, kind: input, shape index: {}]
  %s10 = inlined_call_operand.vmem [shape: f32[16,384], index: 10, kind: output, shape index: {0}]
  %s11 = inlined_call_operand.vmem [shape: f32[16,256], index: 11, kind: output, shape index: {1}]
  %12 = xla_tuple %s10, %s11
  %s13 = sld [smem:[#allocation0]]
  $region74: #{vae_forward.1} parent=0
    _
  %s15 = ssub.s32 1, %s13
  %s16 = scalar_select 0, %s15, %s13
  $region1: #{vae_forward.1} parent=0
    #allocation2 [shape = 'u8[393216]{0}', space=vmem, size = 0x60000, scoped, tag = 'input window, operand 2, single buffered']
    #allocation3 [shape = 's32[1]{0}', space=sflag, size = 0x4, scoped, tag = 'scoped memory for vae_forward.1']
    #allocation4 [shape = 'u8[262144]{0}', space=vmem, size = 0x40000, scoped, tag = 'input window, operand 4, single buffered']
    #allocation5 [shape = 's32[1]{0}', space=sflag, size = 0x4, scoped, tag = 'scoped memory for vae_forward.1']
    #allocation6 [shape = 'u8[131072]{0}', space=vmem, size = 0x20000, scoped, tag = 'input window, operand 6, single buffered']
    #allocation7 [shape = 'u8[393216]{0}', space=vmem, size = 0x60000, scoped, tag = 'input window, operand 8, single buffered']
    #allocation8 [shape = 's32[1]{0}', space=sflag, size = 0x4, scoped, tag = 'scoped memory for vae_forward.1']
    %17 = vsyncpa [#allocation3], 0
    %18 = vsyncpa [#allocation5], 0
    %19 = vsyncpa [#allocation8], 0
    // Predicated region
    $region2: #{vae_forward.1} parent=1 // pred_check
      _
    $region3: #{vae_forward.1} parent=1 // pred_check_branch
      %21 = sbr.rel (0) target = $region5
    $region4: #{vae_forward.1} parent=1 // pred_region
      _
    $region5: #{vae_forward.1} parent=1 // pred_fallthru
      _
    // Predicated region
    $region6: #{vae_forward.1} parent=1 // pred_check
      _
    $region7: #{vae_forward.1} parent=1 // pred_check_branch
      %23 = sbr.rel (0) target = $region9
    $region8: #{vae_forward.1} parent=1 // pred_region
      _
    $region9: #{vae_forward.1} parent=1 // pred_fallthru
      _
    // Predicated region
    $region10: #{vae_forward.1} parent=1 // pred_check
      _
    $region11: #{vae_forward.1} parent=1 // pred_check_branch
      %25 = sbr.rel (0) target = $region13
    $region12: #{vae_forward.1} parent=1 // pred_region
      %s27 = ssub.s32 12288, 12288
      %28 = vsyncadd [#allocation3], %s27
      %s29 = sshll.u32 [#allocation2], 4
      %s30 = int_to_ptr.vmem [resolvable:$true] %s29
      %35 = dma.hbm_to_vmem [thread:$0]  %s2, 12288, %s30, [#allocation3], 256, 256, 16
    $region13: #{vae_forward.1} parent=1 // pred_fallthru
      _
    // Predicated region
    $region14: #{vae_forward.1} parent=1 // pred_check
      _
    $region15: #{vae_forward.1} parent=1 // pred_check_branch
      %37 = sbr.rel (0) target = $region17
    $region16: #{vae_forward.1} parent=1 // pred_region
      _
    $region17: #{vae_forward.1} parent=1 // pred_fallthru
      _
    // Predicated region
    $region18: #{vae_forward.1} parent=1 // pred_check
      _
    $region19: #{vae_forward.1} parent=1 // pred_check_branch
      %39 = sbr.rel (0) target = $region21
    $region20: #{vae_forward.1} parent=1 // pred_region
      %s41 = ssub.s32 8192, 8192
      %42 = vsyncadd [#allocation5], %s41
      %s43 = sshll.u32 [#allocation4], 4
      %s44 = int_to_ptr.vmem [resolvable:$true] %s43
      %49 = dma.hbm_to_vmem [thread:$0]  %s4, 8192, %s44, [#allocation5], 128, 128, 8
    $region21: #{vae_forward.1} parent=1 // pred_fallthru
      _
    // Predicated region
    $region22: #{vae_forward.1} parent=1 // pred_check
      _
    $region23: #{vae_forward.1} parent=1 // pred_check_branch
      %51 = sbr.rel (0) target = $region25
    $region24: #{vae_forward.1} parent=1 // pred_region
      _
    $region25: #{vae_forward.1} parent=1 // pred_fallthru
      _
    // Predicated region
    $region26: #{vae_forward.1} parent=1 // pred_check
      _
    $region27: #{vae_forward.1} parent=1 // pred_check_branch
      %53 = sbr.rel (0) target = $region29
    $region28: #{vae_forward.1} parent=1 // pred_region
      %s55 = ssub.s32 4096, 4096
      %56 = vsyncadd [#allocation5], %s55
      %s57 = sshll.u32 [#allocation6], 4
      %s58 = int_to_ptr.vmem [resolvable:$true] %s57
      %63 = dma.hbm_to_vmem [thread:$0]  %s6, 4096, %s58, [#allocation5], 256, 256, 16
    $region29: #{vae_forward.1} parent=1 // pred_fallthru
      _
    // Predicated region
    $region30: #{vae_forward.1} parent=1 // pred_check
      _
    $region31: #{vae_forward.1} parent=1 // pred_check_branch
      %65 = sbr.rel (0) target = $region33
    $region32: #{vae_forward.1} parent=1 // pred_region
      _
    $region33: #{vae_forward.1} parent=1 // pred_fallthru
      _
    // Predicated region
    $region34: #{vae_forward.1} parent=1 // pred_check
      _
    $region35: #{vae_forward.1} parent=1 // pred_check_branch
      %67 = sbr.rel (0) target = $region37
    $region36: #{vae_forward.1} parent=1 // pred_region
      %s69 = ssub.s32 12288, 12288
      %70 = vsyncadd [#allocation8], %s69
      %s71 = sshll.u32 [#allocation7], 4
      %s72 = int_to_ptr.vmem [resolvable:$true] %s71
      %77 = dma.hbm_to_vmem [thread:$0]  %s8, 12288, %s72, [#allocation8], 192, 192, 12
    $region37: #{vae_forward.1} parent=1 // pred_fallthru
      _
    // Predicated region
    $region38: #{vae_forward.1} parent=1 // pred_check
      _
    $region39: #{vae_forward.1} parent=1 // pred_check_branch
      %79 = sbr.rel (0) target = $region41
    $region40: #{vae_forward.1} parent=1 // pred_region
      _
    $region41: #{vae_forward.1} parent=1 // pred_fallthru
      _
    // Predicated region
    $region42: #{vae_forward.1} parent=1 // pred_check
      _
    $region43: #{vae_forward.1} parent=1 // pred_check_branch
      %81 = sbr.rel (0) target = $region45
    $region44: #{vae_forward.1} parent=1 // pred_region
      %82 = dma.done [#allocation3], 12288
    $region45: #{vae_forward.1} parent=1 // pred_fallthru
      _
    // Predicated region
    $region46: #{vae_forward.1} parent=1 // pred_check
      _
    $region47: #{vae_forward.1} parent=1 // pred_check_branch
      %84 = sbr.rel (0) target = $region49
    $region48: #{vae_forward.1} parent=1 // pred_region
      %85 = dma.done [#allocation5], 8192
    $region49: #{vae_forward.1} parent=1 // pred_fallthru
      _
    // Predicated region
    $region50: #{vae_forward.1} parent=1 // pred_check
      _
    $region51: #{vae_forward.1} parent=1 // pred_check_branch
      %87 = sbr.rel (0) target = $region53
    $region52: #{vae_forward.1} parent=1 // pred_region
      %88 = dma.done [#allocation5], 4096
    $region53: #{vae_forward.1} parent=1 // pred_fallthru
      _
    // Predicated region
    $region54: #{vae_forward.1} parent=1 // pred_check
      _
    $region55: #{vae_forward.1} parent=1 // pred_check_branch
      %90 = sbr.rel (0) target = $region57
    $region56: #{vae_forward.1} parent=1 // pred_region
      %91 = dma.done [#allocation8], 12288
    $region57: #{vae_forward.1} parent=1 // pred_fallthru
      _
    %v93 = vld [vmem:[%s0] sm:$0xff]
    %v94 = vld [vmem:[%s0 + $0x8] sm:$0xf]
    %v95 = vld [vmem:[%s0 + $0xc] sm:$0xff]
    %v96 = vld [vmem:[%s0 + $0x14] sm:$0xf]
    %v97 = vld [vmem:[#allocation2] sm:$0xff]
    %v98 = vld [vmem:[#allocation2 + $0x8] sm:$0xff]
    %v99 = vld [vmem:[#allocation2 + $0x10] sm:$0xff]
    %v100 = vld [vmem:[#allocation2 + $0x18] sm:$0xff]
    %v101 = vld [vmem:[#allocation2 + $0x20] sm:$0xff]
    %v102 = vld [vmem:[#allocation2 + $0x28] sm:$0xff]
    %v103 = vld [vmem:[#allocation2 + $0x30] sm:$0xff]
    %v104 = vld [vmem:[#allocation2 + $0x38] sm:$0xff]
    %v105 = vld [vmem:[#allocation2 + $0x40] sm:$0xff]
    %v106 = vld [vmem:[#allocation2 + $0x48] sm:$0xff]
    %v107 = vld [vmem:[#allocation2 + $0x50] sm:$0xff]
    %v108 = vld [vmem:[#allocation2 + $0x58] sm:$0xff]
    %v109 = vld [vmem:[#allocation2 + $0x60] sm:$0xff]
    %v110 = vld [vmem:[#allocation2 + $0x68] sm:$0xff]
    %v111 = vld [vmem:[#allocation2 + $0x70] sm:$0xff]
    %v112 = vld [vmem:[#allocation2 + $0x78] sm:$0xff]
    %v113 = vld [vmem:[#allocation2 + $0x80] sm:$0xff]
    %v114 = vld [vmem:[#allocation2 + $0x88] sm:$0xff]
    %v115 = vld [vmem:[#allocation2 + $0x90] sm:$0xff]
    %v116 = vld [vmem:[#allocation2 + $0x98] sm:$0xff]
    %v117 = vld [vmem:[#allocation2 + $0xa0] sm:$0xff]
    %v118 = vld [vmem:[#allocation2 + $0xa8] sm:$0xff]
    %v119 = vld [vmem:[#allocation2 + $0xb0] sm:$0xff]
    %v120 = vld [vmem:[#allocation2 + $0xb8] sm:$0xff]
    %v121 = vld [vmem:[#allocation2 + $0xc0] sm:$0xff]
    %v122 = vld [vmem:[#allocation2 + $0xc8] sm:$0xff]
    %v123 = vld [vmem:[#allocation2 + $0xd0] sm:$0xff]
    %v124 = vld [vmem:[#allocation2 + $0xd8] sm:$0xff]
    %v125 = vld [vmem:[#allocation2 + $0xe0] sm:$0xff]
    %v126 = vld [vmem:[#allocation2 + $0xe8] sm:$0xff]
    %v127 = vld [vmem:[#allocation2 + $0xf0] sm:$0xff]
    %v128 = vld [vmem:[#allocation2 + $0xf8] sm:$0xff]
    %v129 = vld [vmem:[#allocation2 + $0x100] sm:$0xff]
    %v130 = vld [vmem:[#allocation2 + $0x108] sm:$0xff]
    %v131 = vld [vmem:[#allocation2 + $0x110] sm:$0xff]
    %v132 = vld [vmem:[#allocation2 + $0x118] sm:$0xff]
    %v133 = vld [vmem:[#allocation2 + $0x120] sm:$0xff]
    %v134 = vld [vmem:[#allocation2 + $0x128] sm:$0xff]
    %v135 = vld [vmem:[#allocation2 + $0x130] sm:$0xff]
    %v136 = vld [vmem:[#allocation2 + $0x138] sm:$0xff]
    %v137 = vld [vmem:[#allocation2 + $0x140] sm:$0xff]
    %v138 = vld [vmem:[#allocation2 + $0x148] sm:$0xff]
    %v139 = vld [vmem:[#allocation2 + $0x150] sm:$0xff]
    %v140 = vld [vmem:[#allocation2 + $0x158] sm:$0xff]
    %v141 = vld [vmem:[#allocation2 + $0x160] sm:$0xff]
    %v142 = vld [vmem:[#allocation2 + $0x168] sm:$0xff]
    %v143 = vld [vmem:[#allocation2 + $0x170] sm:$0xff]
    %v144 = vld [vmem:[#allocation2 + $0x178] sm:$0xff]
    %v145 = vld [vmem:[#allocation2 + $0x180] sm:$0xff]
    %v146 = vld [vmem:[#allocation2 + $0x188] sm:$0xff]
    %v147 = vld [vmem:[#allocation2 + $0x190] sm:$0xff]
    %v148 = vld [vmem:[#allocation2 + $0x198] sm:$0xff]
    %v149 = vld [vmem:[#allocation2 + $0x1a0] sm:$0xff]
    %v150 = vld [vmem:[#allocation2 + $0x1a8] sm:$0xff]
    %v151 = vld [vmem:[#allocation2 + $0x1b0] sm:$0xff]
    %v152 = vld [vmem:[#allocation2 + $0x1b8] sm:$0xff]
    %v153 = vld [vmem:[#allocation2 + $0x1c0] sm:$0xff]
    %v154 = vld [vmem:[#allocation2 + $0x1c8] sm:$0xff]
    %v155 = vld [vmem:[#allocation2 + $0x1d0] sm:$0xff]
    %v156 = vld [vmem:[#allocation2 + $0x1d8] sm:$0xff]
    %v157 = vld [vmem:[#allocation2 + $0x1e0] sm:$0xff]
    %v158 = vld [vmem:[#allocation2 + $0x1e8] sm:$0xff]
    %v159 = vld [vmem:[#allocation2 + $0x1f0] sm:$0xff]
    %v160 = vld [vmem:[#allocation2 + $0x1f8] sm:$0xff]
    %v161 = vld [vmem:[#allocation2 + $0x200] sm:$0xff]
    %v162 = vld [vmem:[#allocation2 + $0x208] sm:$0xff]
    %v163 = vld [vmem:[#allocation2 + $0x210] sm:$0xff]
    %v164 = vld [vmem:[#allocation2 + $0x218] sm:$0xff]
    %v165 = vld [vmem:[#allocation2 + $0x220] sm:$0xff]
    %v166 = vld [vmem:[#allocation2 + $0x228] sm:$0xff]
    %v167 = vld [vmem:[#allocation2 + $0x230] sm:$0xff]
    %v168 = vld [vmem:[#allocation2 + $0x238] sm:$0xff]
    %v169 = vld [vmem:[#allocation2 + $0x240] sm:$0xff]
    %v170 = vld [vmem:[#allocation2 + $0x248] sm:$0xff]
    %v171 = vld [vmem:[#allocation2 + $0x250] sm:$0xff]
    %v172 = vld [vmem:[#allocation2 + $0x258] sm:$0xff]
    %v173 = vld [vmem:[#allocation2 + $0x260] sm:$0xff]
    %v174 = vld [vmem:[#allocation2 + $0x268] sm:$0xff]
    %v175 = vld [vmem:[#allocation2 + $0x270] sm:$0xff]
    %v176 = vld [vmem:[#allocation2 + $0x278] sm:$0xff]
    %v177 = vld [vmem:[#allocation2 + $0x280] sm:$0xff]
    %v178 = vld [vmem:[#allocation2 + $0x288] sm:$0xff]
    %v179 = vld [vmem:[#allocation2 + $0x290] sm:$0xff]
    %v180 = vld [vmem:[#allocation2 + $0x298] sm:$0xff]
    %v181 = vld [vmem:[#allocation2 + $0x2a0] sm:$0xff]
    %v182 = vld [vmem:[#allocation2 + $0x2a8] sm:$0xff]
    %v183 = vld [vmem:[#allocation2 + $0x2b0] sm:$0xff]
    %v184 = vld [vmem:[#allocation2 + $0x2b8] sm:$0xff]
    %v185 = vld [vmem:[#allocation2 + $0x2c0] sm:$0xff]
    %v186 = vld [vmem:[#allocation2 + $0x2c8] sm:$0xff]
    %v187 = vld [vmem:[#allocation2 + $0x2d0] sm:$0xff]
    %v188 = vld [vmem:[#allocation2 + $0x2d8] sm:$0xff]
    %v189 = vld [vmem:[#allocation2 + $0x2e0] sm:$0xff]
    %v190 = vld [vmem:[#allocation2 + $0x2e8] sm:$0xff]
    %v191 = vld [vmem:[#allocation2 + $0x2f0] sm:$0xff]
    %v192 = vld [vmem:[#allocation2 + $0x2f8] sm:$0xff]
    %v193 = vld [vmem:[%s3] sm:$0xf]
    %v195 = vlaneseq
    %v196 = vshrl.u32 %v195, 7
    %v197 = vsub.s32 0, %v196
    %v198 = vrot.slane %v193, %v197
    %v199 = vlaneseq
    %v200 = vshrl.u32 %v199, 7
    %v201 = vsub.s32 1, %v200
    %v202 = vrot.slane %v193, %v201
    %v203 = vlaneseq
    %v204 = vshrl.u32 %v203, 7
    %v205 = vsub.s32 2, %v204
    %v206 = vrot.slane %v193, %v205
    %v207 = vlaneseq
    %v208 = vshrl.u32 %v207, 7
    %v209 = vsub.s32 3, %v208
    %v210 = vrot.slane %v193, %v209
    %v219 = vunpack.c.l.b16 %v93
    %v220 = vunpack.c.h.b16 %v93
    %v221 = vunpack.c.l.b16 %v94
    %v222 = vunpack.c.l.b16 %v95
    %v223 = vunpack.c.h.b16 %v95
    %v224 = vunpack.c.l.b16 %v96
    %v225 = vpack.c.b16 %v222, %v219
    %v226 = vpack.c.b16 %v223, %v220
    %v227 = vpack.c.b16 %v224, %v221
    %v327 = vunpack.c.l.b16 %v97
    %v328 = vunpack.c.h.b16 %v97
    %v329 = vunpack.c.l.b16 %v98
    %v330 = vunpack.c.h.b16 %v98
    %v331 = vunpack.c.l.b16 %v99
    %v332 = vunpack.c.h.b16 %v99
    %v333 = vunpack.c.l.b16 %v100
    %v334 = vunpack.c.h.b16 %v100
    %v335 = vunpack.c.l.b16 %v101
    %v336 = vunpack.c.h.b16 %v101
    %v337 = vunpack.c.l.b16 %v102
    %v338 = vunpack.c.h.b16 %v102
    %v339 = vunpack.c.l.b16 %v103
    %v340 = vunpack.c.h.b16 %v103
    %v341 = vunpack.c.l.b16 %v104
    %v342 = vunpack.c.h.b16 %v104
    %v343 = vunpack.c.l.b16 %v105
    %v344 = vunpack.c.h.b16 %v105
    %v345 = vunpack.c.l.b16 %v106
    %v346 = vunpack.c.h.b16 %v106
    %v347 = vunpack.c.l.b16 %v107
    %v348 = vunpack.c.h.b16 %v107
    %v349 = vunpack.c.l.b16 %v108
    %v350 = vunpack.c.h.b16 %v108
    %v351 = vunpack.c.l.b16 %v109
    %v352 = vunpack.c.h.b16 %v109
    %v353 = vunpack.c.l.b16 %v110
    %v354 = vunpack.c.h.b16 %v110
    %v355 = vunpack.c.l.b16 %v111
    %v356 = vunpack.c.h.b16 %v111
    %v357 = vunpack.c.l.b16 %v112
    %v358 = vunpack.c.h.b16 %v112
    %v359 = vunpack.c.l.b16 %v113
    %v360 = vunpack.c.h.b16 %v113
    %v361 = vunpack.c.l.b16 %v114
    %v362 = vunpack.c.h.b16 %v114
    %v363 = vunpack.c.l.b16 %v115
    %v364 = vunpack.c.h.b16 %v115
    %v365 = vunpack.c.l.b16 %v116
    %v366 = vunpack.c.h.b16 %v116
    %v367 = vunpack.c.l.b16 %v117
    %v368 = vunpack.c.h.b16 %v117
    %v369 = vunpack.c.l.b16 %v118
    %v370 = vunpack.c.h.b16 %v118
    %v371 = vunpack.c.l.b16 %v119
    %v372 = vunpack.c.h.b16 %v119
    %v373 = vunpack.c.l.b16 %v120
    %v374 = vunpack.c.h.b16 %v120
    %v375 = vunpack.c.l.b16 %v121
    %v376 = vunpack.c.h.b16 %v121
    %v377 = vunpack.c.l.b16 %v122
    %v378 = vunpack.c.h.b16 %v122
    %v379 = vunpack.c.l.b16 %v123
    %v380 = vunpack.c.h.b16 %v123
    %v381 = vunpack.c.l.b16 %v124
    %v382 = vunpack.c.h.b16 %v124
    %v383 = vunpack.c.l.b16 %v125
    %v384 = vunpack.c.h.b16 %v125
    %v385 = vunpack.c.l.b16 %v126
    %v386 = vunpack.c.h.b16 %v126
    %v387 = vunpack.c.l.b16 %v127
    %v388 = vunpack.c.h.b16 %v127
    %v389 = vunpack.c.l.b16 %v128
    %v390 = vunpack.c.h.b16 %v128
    %v391 = vunpack.c.l.b16 %v129
    %v392 = vunpack.c.h.b16 %v129
    %v393 = vunpack.c.l.b16 %v130
    %v394 = vunpack.c.h.b16 %v130
    %v395 = vunpack.c.l.b16 %v131
    %v396 = vunpack.c.h.b16 %v131
    %v397 = vunpack.c.l.b16 %v132
    %v398 = vunpack.c.h.b16 %v132
    %v399 = vunpack.c.l.b16 %v133
    %v400 = vunpack.c.h.b16 %v133
    %v401 = vunpack.c.l.b16 %v134
    %v402 = vunpack.c.h.b16 %v134
    %v403 = vunpack.c.l.b16 %v135
    %v404 = vunpack.c.h.b16 %v135
    %v405 = vunpack.c.l.b16 %v136
    %v406 = vunpack.c.h.b16 %v136
    %v407 = vunpack.c.l.b16 %v137
    %v408 = vunpack.c.h.b16 %v137
    %v409 = vunpack.c.l.b16 %v138
    %v410 = vunpack.c.h.b16 %v138
    %v411 = vunpack.c.l.b16 %v139
    %v412 = vunpack.c.h.b16 %v139
    %v413 = vunpack.c.l.b16 %v140
    %v414 = vunpack.c.h.b16 %v140
    %v415 = vunpack.c.l.b16 %v141
    %v416 = vunpack.c.h.b16 %v141
    %v417 = vunpack.c.l.b16 %v142
    %v418 = vunpack.c.h.b16 %v142
    %v419 = vunpack.c.l.b16 %v143
    %v420 = vunpack.c.h.b16 %v143
    %v421 = vunpack.c.l.b16 %v144
    %v422 = vunpack.c.h.b16 %v144
    %v423 = vunpack.c.l.b16 %v145
    %v424 = vunpack.c.h.b16 %v145
    %v425 = vunpack.c.l.b16 %v146
    %v426 = vunpack.c.h.b16 %v146
    %v427 = vunpack.c.l.b16 %v147
    %v428 = vunpack.c.h.b16 %v147
    %v429 = vunpack.c.l.b16 %v148
    %v430 = vunpack.c.h.b16 %v148
    %v431 = vunpack.c.l.b16 %v149
    %v432 = vunpack.c.h.b16 %v149
    %v433 = vunpack.c.l.b16 %v150
    %v434 = vunpack.c.h.b16 %v150
    %v435 = vunpack.c.l.b16 %v151
    %v436 = vunpack.c.h.b16 %v151
    %v437 = vunpack.c.l.b16 %v152
    %v438 = vunpack.c.h.b16 %v152
    %v439 = vunpack.c.l.b16 %v153
    %v440 = vunpack.c.h.b16 %v153
    %v441 = vunpack.c.l.b16 %v154
    %v442 = vunpack.c.h.b16 %v154
    %v443 = vunpack.c.l.b16 %v155
    %v444 = vunpack.c.h.b16 %v155
    %v445 = vunpack.c.l.b16 %v156
    %v446 = vunpack.c.h.b16 %v156
    %v447 = vunpack.c.l.b16 %v157
    %v448 = vunpack.c.h.b16 %v157
    %v449 = vunpack.c.l.b16 %v158
    %v450 = vunpack.c.h.b16 %v158
    %v451 = vunpack.c.l.b16 %v159
    %v452 = vunpack.c.h.b16 %v159
    %v453 = vunpack.c.l.b16 %v160
    %v454 = vunpack.c.h.b16 %v160
    %v455 = vunpack.c.l.b16 %v161
    %v456 = vunpack.c.h.b16 %v161
    %v457 = vunpack.c.l.b16 %v162
    %v458 = vunpack.c.h.b16 %v162
    %v459 = vunpack.c.l.b16 %v163
    %v460 = vunpack.c.h.b16 %v163
    %v461 = vunpack.c.l.b16 %v164
    %v462 = vunpack.c.h.b16 %v164
    %v463 = vunpack.c.l.b16 %v165
    %v464 = vunpack.c.h.b16 %v165
    %v465 = vunpack.c.l.b16 %v166
    %v466 = vunpack.c.h.b16 %v166
    %v467 = vunpack.c.l.b16 %v167
    %v468 = vunpack.c.h.b16 %v167
    %v469 = vunpack.c.l.b16 %v168
    %v470 = vunpack.c.h.b16 %v168
    %v471 = vunpack.c.l.b16 %v169
    %v472 = vunpack.c.h.b16 %v169
    %v473 = vunpack.c.l.b16 %v170
    %v474 = vunpack.c.h.b16 %v170
    %v475 = vunpack.c.l.b16 %v171
    %v476 = vunpack.c.h.b16 %v171
    %v477 = vunpack.c.l.b16 %v172
    %v478 = vunpack.c.h.b16 %v172
    %v479 = vunpack.c.l.b16 %v173
    %v480 = vunpack.c.h.b16 %v173
    %v481 = vunpack.c.l.b16 %v174
    %v482 = vunpack.c.h.b16 %v174
    %v483 = vunpack.c.l.b16 %v175
    %v484 = vunpack.c.h.b16 %v175
    %v485 = vunpack.c.l.b16 %v176
    %v486 = vunpack.c.h.b16 %v176
    %v487 = vunpack.c.l.b16 %v177
    %v488 = vunpack.c.h.b16 %v177
    %v489 = vunpack.c.l.b16 %v178
    %v490 = vunpack.c.h.b16 %v178
    %v491 = vunpack.c.l.b16 %v179
    %v492 = vunpack.c.h.b16 %v179
    %v493 = vunpack.c.l.b16 %v180
    %v494 = vunpack.c.h.b16 %v180
    %v495 = vunpack.c.l.b16 %v181
    %v496 = vunpack.c.h.b16 %v181
    %v497 = vunpack.c.l.b16 %v182
    %v498 = vunpack.c.h.b16 %v182
    %v499 = vunpack.c.l.b16 %v183
    %v500 = vunpack.c.h.b16 %v183
    %v501 = vunpack.c.l.b16 %v184
    %v502 = vunpack.c.h.b16 %v184
    %v503 = vunpack.c.l.b16 %v185
    %v504 = vunpack.c.h.b16 %v185
    %v505 = vunpack.c.l.b16 %v186
    %v506 = vunpack.c.h.b16 %v186
    %v507 = vunpack.c.l.b16 %v187
    %v508 = vunpack.c.h.b16 %v187
    %v509 = vunpack.c.l.b16 %v188
    %v510 = vunpack.c.h.b16 %v188
    %v511 = vunpack.c.l.b16 %v189
    %v512 = vunpack.c.h.b16 %v189
    %v513 = vunpack.c.l.b16 %v190
    %v514 = vunpack.c.h.b16 %v190
    %v515 = vunpack.c.l.b16 %v191
    %v516 = vunpack.c.h.b16 %v191
    %v517 = vunpack.c.l.b16 %v192
    %v518 = vunpack.c.h.b16 %v192
    %v519 = vpack.c.b16 %v331, %v327
    %v520 = vpack.c.b16 %v332, %v328
    %v521 = vpack.c.b16 %v333, %v329
    %v522 = vpack.c.b16 %v334, %v330
    %v523 = vpack.c.b16 %v339, %v335
    %v524 = vpack.c.b16 %v340, %v336
    %v525 = vpack.c.b16 %v341, %v337
    %v526 = vpack.c.b16 %v342, %v338
    %v527 = vpack.c.b16 %v347, %v343
    %v528 = vpack.c.b16 %v348, %v344
    %v529 = vpack.c.b16 %v349, %v345
    %v530 = vpack.c.b16 %v350, %v346
    %v531 = vpack.c.b16 %v355, %v351
    %v532 = vpack.c.b16 %v356, %v352
    %v533 = vpack.c.b16 %v357, %v353
    %v534 = vpack.c.b16 %v358, %v354
    %v535 = vpack.c.b16 %v363, %v359
    %v536 = vpack.c.b16 %v364, %v360
    %v537 = vpack.c.b16 %v365, %v361
    %v538 = vpack.c.b16 %v366, %v362
    %v539 = vpack.c.b16 %v371, %v367
    %v540 = vpack.c.b16 %v372, %v368
    %v541 = vpack.c.b16 %v373, %v369
    %v542 = vpack.c.b16 %v374, %v370
    %v543 = vpack.c.b16 %v379, %v375
    %v544 = vpack.c.b16 %v380, %v376
    %v545 = vpack.c.b16 %v381, %v377
    %v546 = vpack.c.b16 %v382, %v378
    %v547 = vpack.c.b16 %v387, %v383
    %v548 = vpack.c.b16 %v388, %v384
    %v549 = vpack.c.b16 %v389, %v385
    %v550 = vpack.c.b16 %v390, %v386
    %v551 = vpack.c.b16 %v395, %v391
    %v552 = vpack.c.b16 %v396, %v392
    %v553 = vpack.c.b16 %v397, %v393
    %v554 = vpack.c.b16 %v398, %v394
    %v555 = vpack.c.b16 %v403, %v399
    %v556 = vpack.c.b16 %v404, %v400
    %v557 = vpack.c.b16 %v405, %v401
    %v558 = vpack.c.b16 %v406, %v402
    %v559 = vpack.c.b16 %v411, %v407
    %v560 = vpack.c.b16 %v412, %v408
    %v561 = vpack.c.b16 %v413, %v409
    %v562 = vpack.c.b16 %v414, %v410
    %v563 = vpack.c.b16 %v419, %v415
    %v564 = vpack.c.b16 %v420, %v416
    %v565 = vpack.c.b16 %v421, %v417
    %v566 = vpack.c.b16 %v422, %v418
    %v567 = vpack.c.b16 %v427, %v423
    %v568 = vpack.c.b16 %v428, %v424
    %v569 = vpack.c.b16 %v429, %v425
    %v570 = vpack.c.b16 %v430, %v426
    %v571 = vpack.c.b16 %v435, %v431
    %v572 = vpack.c.b16 %v436, %v432
    %v573 = vpack.c.b16 %v437, %v433
    %v574 = vpack.c.b16 %v438, %v434
    %v575 = vpack.c.b16 %v443, %v439
    %v576 = vpack.c.b16 %v444, %v440
    %v577 = vpack.c.b16 %v445, %v441
    %v578 = vpack.c.b16 %v446, %v442
    %v579 = vpack.c.b16 %v451, %v447
    %v580 = vpack.c.b16 %v452, %v448
    %v581 = vpack.c.b16 %v453, %v449
    %v582 = vpack.c.b16 %v454, %v450
    %v583 = vpack.c.b16 %v459, %v455
    %v584 = vpack.c.b16 %v460, %v456
    %v585 = vpack.c.b16 %v461, %v457
    %v586 = vpack.c.b16 %v462, %v458
    %v587 = vpack.c.b16 %v467, %v463
    %v588 = vpack.c.b16 %v468, %v464
    %v589 = vpack.c.b16 %v469, %v465
    %v590 = vpack.c.b16 %v470, %v466
    %v591 = vpack.c.b16 %v475, %v471
    %v592 = vpack.c.b16 %v476, %v472
    %v593 = vpack.c.b16 %v477, %v473
    %v594 = vpack.c.b16 %v478, %v474
    %v595 = vpack.c.b16 %v483, %v479
    %v596 = vpack.c.b16 %v484, %v480
    %v597 = vpack.c.b16 %v485, %v481
    %v598 = vpack.c.b16 %v486, %v482
    %v599 = vpack.c.b16 %v491, %v487
    %v600 = vpack.c.b16 %v492, %v488
    %v601 = vpack.c.b16 %v493, %v489
    %v602 = vpack.c.b16 %v494, %v490
    %v603 = vpack.c.b16 %v499, %v495
    %v604 = vpack.c.b16 %v500, %v496
    %v605 = vpack.c.b16 %v501, %v497
    %v606 = vpack.c.b16 %v502, %v498
    %v607 = vpack.c.b16 %v507, %v503
    %v608 = vpack.c.b16 %v508, %v504
    %v609 = vpack.c.b16 %v509, %v505
    %v610 = vpack.c.b16 %v510, %v506
    %v611 = vpack.c.b16 %v515, %v511
    %v612 = vpack.c.b16 %v516, %v512
    %v613 = vpack.c.b16 %v517, %v513
    %v614 = vpack.c.b16 %v518, %v514
    %711 = vmatprep.subr.bf16.mxu0 %v548
    %712 = vmatpush1.bf16.msra.mxu0 %v547
    %713 = vmatprep.subr.bf16.mxu0 %v544
    %714 = vmatpush1.bf16.msra.mxu0 %v543
    %715 = vmatprep.subr.bf16.mxu0 %v540
    %716 = vmatpush1.bf16.msra.mxu0 %v539
    %717 = vmatprep.subr.bf16.mxu0 %v536
    %718 = vmatpush1.bf16.msra.mxu0 %v535
    %719 = vmatprep.subr.bf16.mxu0 %v532
    %720 = vmatpush1.bf16.msra.mxu0 %v531
    %721 = vmatprep.subr.bf16.mxu0 %v528
    %722 = vmatpush1.bf16.msra.mxu0 %v527
    %723 = vmatprep.subr.bf16.mxu0 %v524
    %724 = vmatpush1.bf16.msra.mxu0 %v523
    %725 = vmatprep.subr.bf16.mxu0 %v520
    %726 = vmatpush1.bf16.msra.mxu0 %v519
    %727 = vmatprep.subr.bf16.mxu0 %v580
    %728 = vmatpush2.bf16.msra.mxu0 %v579
    %729 = vmatprep.subr.bf16.mxu0 %v576
    %730 = vmatpush2.bf16.msra.mxu0 %v575
    %731 = vmatprep.subr.bf16.mxu0 %v572
    %732 = vmatpush2.bf16.msra.mxu0 %v571
    %733 = vmatprep.subr.bf16.mxu0 %v568
    %734 = vmatpush2.bf16.msra.mxu0 %v567
    %735 = vmatprep.subr.bf16.mxu0 %v564
    %736 = vmatpush2.bf16.msra.mxu0 %v563
    %737 = vmatprep.subr.bf16.mxu0 %v560
    %738 = vmatpush2.bf16.msra.mxu0 %v559
    %739 = vmatprep.subr.bf16.mxu0 %v556
    %740 = vmatpush2.bf16.msra.mxu0 %v555
    %741 = vmatprep.subr.bf16.mxu0 %v552
    %742 = vmatpush2.bf16.msra.mxu0 %v551
    %743 = vmatprep.mubr.bf16.mxu0 %v226
    %744 = vmatmul.mubr.bf16.gmra.mxu0 %v225
    %v745 = vpop.f32.mrf.mxu0
    %v746 = vadd.f32 %v198, %v745
    %v747 = vpop.f32.mrf.mxu0
    %v748 = vadd.f32 %v202, %v747
    %v749 = vpop.f32.mrf.mxu0
    %v750 = vadd.f32 %v198, %v749
    %v751 = vpop.f32.mrf.mxu0
    %v752 = vadd.f32 %v202, %v751
    %753 = vdwg.mxu0
    %754 = vmatprep.subr.bf16.mxu0 %v612
    %755 = vmatpush1.bf16.msra.mxu0 %v611
    %756 = vmatprep.subr.bf16.mxu0 %v608
    %757 = vmatpush1.bf16.msra.mxu0 %v607
    %758 = vmatprep.subr.bf16.mxu0 %v604
    %759 = vmatpush1.bf16.msra.mxu0 %v603
    %760 = vmatprep.subr.bf16.mxu0 %v600
    %761 = vmatpush1.bf16.msra.mxu0 %v599
    %762 = vmatprep.subr.bf16.mxu0 %v596
    %763 = vmatpush1.bf16.msra.mxu0 %v595
    %764 = vmatprep.subr.bf16.mxu0 %v592
    %765 = vmatpush1.bf16.msra.mxu0 %v591
    %766 = vmatprep.subr.bf16.mxu0 %v588
    %767 = vmatpush1.bf16.msra.mxu0 %v587
    %768 = vmatprep.subr.bf16.mxu0 %v584
    %769 = vmatpush1.bf16.msra.mxu0 %v583
    %770 = vmatprep.subr.bf16.mxu0 0
    %771 = vmatpush2.bf16.msra.mxu0 0
    %772 = vmatprep.subr.bf16.mxu0 0
    %773 = vmatpush2.bf16.msra.mxu0 0
    %774 = vmatprep.subr.bf16.mxu0 0
    %775 = vmatpush2.bf16.msra.mxu0 0
    %776 = vmatprep.subr.bf16.mxu0 0
    %777 = vmatpush2.bf16.msra.mxu0 0
    %778 = vmatprep.subr.bf16.mxu0 0
    %779 = vmatpush2.bf16.msra.mxu0 0
    %780 = vmatprep.subr.bf16.mxu0 0
    %781 = vmatpush2.bf16.msra.mxu0 0
    %782 = vmatprep.subr.bf16.mxu0 0
    %783 = vmatpush2.bf16.msra.mxu0 0
    %784 = vmatprep.subr.bf16.mxu0 0
    %785 = vmatpush2.bf16.msra.mxu0 0
    %786 = vmatprep.mubr.bf16.mxu0 0
    %787 = vmatmul.mubr.bf16.gmra.mxu0 %v227
    %v788 = vpop.f32.mrf.mxu0
    %v789 = vadd.f32 %v746, %v788
    %v790 = vpop.f32.mrf.mxu0
    %v791 = vadd.f32 %v748, %v790
    %v792 = vpop.f32.mrf.mxu0
    %v793 = vadd.f32 %v750, %v792
    %v794 = vpop.f32.mrf.mxu0
    %v795 = vadd.f32 %v752, %v794
    %796 = vdwg.mxu0
    %797 = vmatprep.subr.bf16.mxu0 %v550
    %798 = vmatpush1.bf16.msra.mxu0 %v549
    %799 = vmatprep.subr.bf16.mxu0 %v546
    %800 = vmatpush1.bf16.msra.mxu0 %v545
    %801 = vmatprep.subr.bf16.mxu0 %v542
    %802 = vmatpush1.bf16.msra.mxu0 %v541
    %803 = vmatprep.subr.bf16.mxu0 %v538
    %804 = vmatpush1.bf16.msra.mxu0 %v537
    %805 = vmatprep.subr.bf16.mxu0 %v534
    %806 = vmatpush1.bf16.msra.mxu0 %v533
    %807 = vmatprep.subr.bf16.mxu0 %v530
    %808 = vmatpush1.bf16.msra.mxu0 %v529
    %809 = vmatprep.subr.bf16.mxu0 %v526
    %810 = vmatpush1.bf16.msra.mxu0 %v525
    %811 = vmatprep.subr.bf16.mxu0 %v522
    %812 = vmatpush1.bf16.msra.mxu0 %v521
    %813 = vmatprep.subr.bf16.mxu0 %v582
    %814 = vmatpush2.bf16.msra.mxu0 %v581
    %815 = vmatprep.subr.bf16.mxu0 %v578
    %816 = vmatpush2.bf16.msra.mxu0 %v577
    %817 = vmatprep.subr.bf16.mxu0 %v574
    %818 = vmatpush2.bf16.msra.mxu0 %v573
    %819 = vmatprep.subr.bf16.mxu0 %v570
    %820 = vmatpush2.bf16.msra.mxu0 %v569
    %821 = vmatprep.subr.bf16.mxu0 %v566
    %822 = vmatpush2.bf16.msra.mxu0 %v565
    %823 = vmatprep.subr.bf16.mxu0 %v562
    %824 = vmatpush2.bf16.msra.mxu0 %v561
    %825 = vmatprep.subr.bf16.mxu0 %v558
    %826 = vmatpush2.bf16.msra.mxu0 %v557
    %827 = vmatprep.subr.bf16.mxu0 %v554
    %828 = vmatpush2.bf16.msra.mxu0 %v553
    %829 = vmatprep.mubr.bf16.mxu0 %v226
    %830 = vmatmul.mubr.bf16.gmra.mxu0 %v225
    %v831 = vpop.f32.mrf.mxu0
    %v832 = vadd.f32 %v206, %v831
    %v833 = vpop.f32.mrf.mxu0
    %v834 = vadd.f32 %v210, %v833
    %v835 = vpop.f32.mrf.mxu0
    %v836 = vadd.f32 %v206, %v835
    %v837 = vpop.f32.mrf.mxu0
    %v838 = vadd.f32 %v210, %v837
    %839 = vdwg.mxu0
    %840 = vmatprep.subr.bf16.mxu0 %v614
    %841 = vmatpush1.bf16.msra.mxu0 %v613
    %842 = vmatprep.subr.bf16.mxu0 %v610
    %843 = vmatpush1.bf16.msra.mxu0 %v609
    %844 = vmatprep.subr.bf16.mxu0 %v606
    %845 = vmatpush1.bf16.msra.mxu0 %v605
    %846 = vmatprep.subr.bf16.mxu0 %v602
    %847 = vmatpush1.bf16.msra.mxu0 %v601
    %848 = vmatprep.subr.bf16.mxu0 %v598
    %849 = vmatpush1.bf16.msra.mxu0 %v597
    %850 = vmatprep.subr.bf16.mxu0 %v594
    %851 = vmatpush1.bf16.msra.mxu0 %v593
    %852 = vmatprep.subr.bf16.mxu0 %v590
    %853 = vmatpush1.bf16.msra.mxu0 %v589
    %854 = vmatprep.subr.bf16.mxu0 %v586
    %855 = vmatpush1.bf16.msra.mxu0 %v585
    %856 = vmatprep.subr.bf16.mxu0 0
    %857 = vmatpush2.bf16.msra.mxu0 0
    %858 = vmatprep.subr.bf16.mxu0 0
    %859 = vmatpush2.bf16.msra.mxu0 0
    %860 = vmatprep.subr.bf16.mxu0 0
    %861 = vmatpush2.bf16.msra.mxu0 0
    %862 = vmatprep.subr.bf16.mxu0 0
    %863 = vmatpush2.bf16.msra.mxu0 0
    %864 = vmatprep.subr.bf16.mxu0 0
    %865 = vmatpush2.bf16.msra.mxu0 0
    %866 = vmatprep.subr.bf16.mxu0 0
    %867 = vmatpush2.bf16.msra.mxu0 0
    %868 = vmatprep.subr.bf16.mxu0 0
    %869 = vmatpush2.bf16.msra.mxu0 0
    %870 = vmatprep.subr.bf16.mxu0 0
    %871 = vmatpush2.bf16.msra.mxu0 0
    %872 = vmatprep.mubr.bf16.mxu0 0
    %873 = vmatmul.mubr.bf16.gmra.mxu0 %v227
    %v874 = vpop.f32.mrf.mxu0
    %v875 = vadd.f32 %v832, %v874
    %v876 = vpop.f32.mrf.mxu0
    %v877 = vadd.f32 %v834, %v876
    %v878 = vpop.f32.mrf.mxu0
    %v879 = vadd.f32 %v836, %v878
    %v880 = vpop.f32.mrf.mxu0
    %v881 = vadd.f32 %v838, %v880
    %882 = vdwg.mxu0
    %v883 = vmax.f32 %v789, 0.0
    %v884 = vmax.f32 %v791, 0.0
    %v885 = vmax.f32 %v875, 0.0
    %v886 = vmax.f32 %v877, 0.0
    %v887 = vmax.f32 %v793, 0.0
    %v888 = vmax.f32 %v795, 0.0
    %v889 = vmax.f32 %v879, 0.0
    %v890 = vmax.f32 %v881, 0.0
    %v891 = vpack.c.bf16 %v887, %v883
    %v892 = vpack.c.bf16 %v888, %v884
    %v893 = vpack.c.bf16 %v889, %v885
    %v894 = vpack.c.bf16 %v890, %v886
    %v895 = vld [vmem:[#allocation4] sm:$0xff]
    %v896 = vld [vmem:[#allocation4 + $0x8] sm:$0xff]
    %v897 = vld [vmem:[#allocation4 + $0x10] sm:$0xff]
    %v898 = vld [vmem:[#allocation4 + $0x18] sm:$0xff]
    %v899 = vld [vmem:[#allocation4 + $0x20] sm:$0xff]
    %v900 = vld [vmem:[#allocation4 + $0x28] sm:$0xff]
    %v901 = vld [vmem:[#allocation4 + $0x30] sm:$0xff]
    %v902 = vld [vmem:[#allocation4 + $0x38] sm:$0xff]
    %v903 = vld [vmem:[#allocation4 + $0x40] sm:$0xff]
    %v904 = vld [vmem:[#allocation4 + $0x48] sm:$0xff]
    %v905 = vld [vmem:[#allocation4 + $0x50] sm:$0xff]
    %v906 = vld [vmem:[#allocation4 + $0x58] sm:$0xff]
    %v907 = vld [vmem:[#allocation4 + $0x60] sm:$0xff]
    %v908 = vld [vmem:[#allocation4 + $0x68] sm:$0xff]
    %v909 = vld [vmem:[#allocation4 + $0x70] sm:$0xff]
    %v910 = vld [vmem:[#allocation4 + $0x78] sm:$0xff]
    %v911 = vld [vmem:[#allocation4 + $0x80] sm:$0xff]
    %v912 = vld [vmem:[#allocation4 + $0x88] sm:$0xff]
    %v913 = vld [vmem:[#allocation4 + $0x90] sm:$0xff]
    %v914 = vld [vmem:[#allocation4 + $0x98] sm:$0xff]
    %v915 = vld [vmem:[#allocation4 + $0xa0] sm:$0xff]
    %v916 = vld [vmem:[#allocation4 + $0xa8] sm:$0xff]
    %v917 = vld [vmem:[#allocation4 + $0xb0] sm:$0xff]
    %v918 = vld [vmem:[#allocation4 + $0xb8] sm:$0xff]
    %v919 = vld [vmem:[#allocation4 + $0xc0] sm:$0xff]
    %v920 = vld [vmem:[#allocation4 + $0xc8] sm:$0xff]
    %v921 = vld [vmem:[#allocation4 + $0xd0] sm:$0xff]
    %v922 = vld [vmem:[#allocation4 + $0xd8] sm:$0xff]
    %v923 = vld [vmem:[#allocation4 + $0xe0] sm:$0xff]
    %v924 = vld [vmem:[#allocation4 + $0xe8] sm:$0xff]
    %v925 = vld [vmem:[#allocation4 + $0xf0] sm:$0xff]
    %v926 = vld [vmem:[#allocation4 + $0xf8] sm:$0xff]
    %v927 = vld [vmem:[#allocation4 + $0x100] sm:$0xff]
    %v928 = vld [vmem:[#allocation4 + $0x108] sm:$0xff]
    %v929 = vld [vmem:[#allocation4 + $0x110] sm:$0xff]
    %v930 = vld [vmem:[#allocation4 + $0x118] sm:$0xff]
    %v931 = vld [vmem:[#allocation4 + $0x120] sm:$0xff]
    %v932 = vld [vmem:[#allocation4 + $0x128] sm:$0xff]
    %v933 = vld [vmem:[#allocation4 + $0x130] sm:$0xff]
    %v934 = vld [vmem:[#allocation4 + $0x138] sm:$0xff]
    %v935 = vld [vmem:[#allocation4 + $0x140] sm:$0xff]
    %v936 = vld [vmem:[#allocation4 + $0x148] sm:$0xff]
    %v937 = vld [vmem:[#allocation4 + $0x150] sm:$0xff]
    %v938 = vld [vmem:[#allocation4 + $0x158] sm:$0xff]
    %v939 = vld [vmem:[#allocation4 + $0x160] sm:$0xff]
    %v940 = vld [vmem:[#allocation4 + $0x168] sm:$0xff]
    %v941 = vld [vmem:[#allocation4 + $0x170] sm:$0xff]
    %v942 = vld [vmem:[#allocation4 + $0x178] sm:$0xff]
    %v943 = vld [vmem:[#allocation4 + $0x180] sm:$0xff]
    %v944 = vld [vmem:[#allocation4 + $0x188] sm:$0xff]
    %v945 = vld [vmem:[#allocation4 + $0x190] sm:$0xff]
    %v946 = vld [vmem:[#allocation4 + $0x198] sm:$0xff]
    %v947 = vld [vmem:[#allocation4 + $0x1a0] sm:$0xff]
    %v948 = vld [vmem:[#allocation4 + $0x1a8] sm:$0xff]
    %v949 = vld [vmem:[#allocation4 + $0x1b0] sm:$0xff]
    %v950 = vld [vmem:[#allocation4 + $0x1b8] sm:$0xff]
    %v951 = vld [vmem:[#allocation4 + $0x1c0] sm:$0xff]
    %v952 = vld [vmem:[#allocation4 + $0x1c8] sm:$0xff]
    %v953 = vld [vmem:[#allocation4 + $0x1d0] sm:$0xff]
    %v954 = vld [vmem:[#allocation4 + $0x1d8] sm:$0xff]
    %v955 = vld [vmem:[#allocation4 + $0x1e0] sm:$0xff]
    %v956 = vld [vmem:[#allocation4 + $0x1e8] sm:$0xff]
    %v957 = vld [vmem:[#allocation4 + $0x1f0] sm:$0xff]
    %v958 = vld [vmem:[#allocation4 + $0x1f8] sm:$0xff]
    %v959 = vld [vmem:[%s5] sm:$0x3]
    %v961 = vlaneseq
    %v962 = vshrl.u32 %v961, 7
    %v963 = vsub.s32 0, %v962
    %v964 = vrot.slane %v959, %v963
    %v965 = vlaneseq
    %v966 = vshrl.u32 %v965, 7
    %v967 = vsub.s32 1, %v966
    %v968 = vrot.slane %v959, %v967
    %v1035 = vunpack.c.l.b16 %v895
    %v1036 = vunpack.c.h.b16 %v895
    %v1037 = vunpack.c.l.b16 %v896
    %v1038 = vunpack.c.h.b16 %v896
    %v1039 = vunpack.c.l.b16 %v897
    %v1040 = vunpack.c.h.b16 %v897
    %v1041 = vunpack.c.l.b16 %v898
    %v1042 = vunpack.c.h.b16 %v898
    %v1043 = vunpack.c.l.b16 %v899
    %v1044 = vunpack.c.h.b16 %v899
    %v1045 = vunpack.c.l.b16 %v900
    %v1046 = vunpack.c.h.b16 %v900
    %v1047 = vunpack.c.l.b16 %v901
    %v1048 = vunpack.c.h.b16 %v901
    %v1049 = vunpack.c.l.b16 %v902
    %v1050 = vunpack.c.h.b16 %v902
    %v1051 = vunpack.c.l.b16 %v903
    %v1052 = vunpack.c.h.b16 %v903
    %v1053 = vunpack.c.l.b16 %v904
    %v1054 = vunpack.c.h.b16 %v904
    %v1055 = vunpack.c.l.b16 %v905
    %v1056 = vunpack.c.h.b16 %v905
    %v1057 = vunpack.c.l.b16 %v906
    %v1058 = vunpack.c.h.b16 %v906
    %v1059 = vunpack.c.l.b16 %v907
    %v1060 = vunpack.c.h.b16 %v907
    %v1061 = vunpack.c.l.b16 %v908
    %v1062 = vunpack.c.h.b16 %v908
    %v1063 = vunpack.c.l.b16 %v909
    %v1064 = vunpack.c.h.b16 %v909
    %v1065 = vunpack.c.l.b16 %v910
    %v1066 = vunpack.c.h.b16 %v910
    %v1067 = vunpack.c.l.b16 %v911
    %v1068 = vunpack.c.h.b16 %v911
    %v1069 = vunpack.c.l.b16 %v912
    %v1070 = vunpack.c.h.b16 %v912
    %v1071 = vunpack.c.l.b16 %v913
    %v1072 = vunpack.c.h.b16 %v913
    %v1073 = vunpack.c.l.b16 %v914
    %v1074 = vunpack.c.h.b16 %v914
    %v1075 = vunpack.c.l.b16 %v915
    %v1076 = vunpack.c.h.b16 %v915
    %v1077 = vunpack.c.l.b16 %v916
    %v1078 = vunpack.c.h.b16 %v916
    %v1079 = vunpack.c.l.b16 %v917
    %v1080 = vunpack.c.h.b16 %v917
    %v1081 = vunpack.c.l.b16 %v918
    %v1082 = vunpack.c.h.b16 %v918
    %v1083 = vunpack.c.l.b16 %v919
    %v1084 = vunpack.c.h.b16 %v919
    %v1085 = vunpack.c.l.b16 %v920
    %v1086 = vunpack.c.h.b16 %v920
    %v1087 = vunpack.c.l.b16 %v921
    %v1088 = vunpack.c.h.b16 %v921
    %v1089 = vunpack.c.l.b16 %v922
    %v1090 = vunpack.c.h.b16 %v922
    %v1091 = vunpack.c.l.b16 %v923
    %v1092 = vunpack.c.h.b16 %v923
    %v1093 = vunpack.c.l.b16 %v924
    %v1094 = vunpack.c.h.b16 %v924
    %v1095 = vunpack.c.l.b16 %v925
    %v1096 = vunpack.c.h.b16 %v925
    %v1097 = vunpack.c.l.b16 %v926
    %v1098 = vunpack.c.h.b16 %v926
    %v1099 = vunpack.c.l.b16 %v927
    %v1100 = vunpack.c.h.b16 %v927
    %v1101 = vunpack.c.l.b16 %v928
    %v1102 = vunpack.c.h.b16 %v928
    %v1103 = vunpack.c.l.b16 %v929
    %v1104 = vunpack.c.h.b16 %v929
    %v1105 = vunpack.c.l.b16 %v930
    %v1106 = vunpack.c.h.b16 %v930
    %v1107 = vunpack.c.l.b16 %v931
    %v1108 = vunpack.c.h.b16 %v931
    %v1109 = vunpack.c.l.b16 %v932
    %v1110 = vunpack.c.h.b16 %v932
    %v1111 = vunpack.c.l.b16 %v933
    %v1112 = vunpack.c.h.b16 %v933
    %v1113 = vunpack.c.l.b16 %v934
    %v1114 = vunpack.c.h.b16 %v934
    %v1115 = vunpack.c.l.b16 %v935
    %v1116 = vunpack.c.h.b16 %v935
    %v1117 = vunpack.c.l.b16 %v936
    %v1118 = vunpack.c.h.b16 %v936
    %v1119 = vunpack.c.l.b16 %v937
    %v1120 = vunpack.c.h.b16 %v937
    %v1121 = vunpack.c.l.b16 %v938
    %v1122 = vunpack.c.h.b16 %v938
    %v1123 = vunpack.c.l.b16 %v939
    %v1124 = vunpack.c.h.b16 %v939
    %v1125 = vunpack.c.l.b16 %v940
    %v1126 = vunpack.c.h.b16 %v940
    %v1127 = vunpack.c.l.b16 %v941
    %v1128 = vunpack.c.h.b16 %v941
    %v1129 = vunpack.c.l.b16 %v942
    %v1130 = vunpack.c.h.b16 %v942
    %v1131 = vunpack.c.l.b16 %v943
    %v1132 = vunpack.c.h.b16 %v943
    %v1133 = vunpack.c.l.b16 %v944
    %v1134 = vunpack.c.h.b16 %v944
    %v1135 = vunpack.c.l.b16 %v945
    %v1136 = vunpack.c.h.b16 %v945
    %v1137 = vunpack.c.l.b16 %v946
    %v1138 = vunpack.c.h.b16 %v946
    %v1139 = vunpack.c.l.b16 %v947
    %v1140 = vunpack.c.h.b16 %v947
    %v1141 = vunpack.c.l.b16 %v948
    %v1142 = vunpack.c.h.b16 %v948
    %v1143 = vunpack.c.l.b16 %v949
    %v1144 = vunpack.c.h.b16 %v949
    %v1145 = vunpack.c.l.b16 %v950
    %v1146 = vunpack.c.h.b16 %v950
    %v1147 = vunpack.c.l.b16 %v951
    %v1148 = vunpack.c.h.b16 %v951
    %v1149 = vunpack.c.l.b16 %v952
    %v1150 = vunpack.c.h.b16 %v952
    %v1151 = vunpack.c.l.b16 %v953
    %v1152 = vunpack.c.h.b16 %v953
    %v1153 = vunpack.c.l.b16 %v954
    %v1154 = vunpack.c.h.b16 %v954
    %v1155 = vunpack.c.l.b16 %v955
    %v1156 = vunpack.c.h.b16 %v955
    %v1157 = vunpack.c.l.b16 %v956
    %v1158 = vunpack.c.h.b16 %v956
    %v1159 = vunpack.c.l.b16 %v957
    %v1160 = vunpack.c.h.b16 %v957
    %v1161 = vunpack.c.l.b16 %v958
    %v1162 = vunpack.c.h.b16 %v958
    %v1163 = vpack.c.b16 %v1037, %v1035
    %v1164 = vpack.c.b16 %v1038, %v1036
    %v1165 = vpack.c.b16 %v1041, %v1039
    %v1166 = vpack.c.b16 %v1042, %v1040
    %v1167 = vpack.c.b16 %v1045, %v1043
    %v1168 = vpack.c.b16 %v1046, %v1044
    %v1169 = vpack.c.b16 %v1049, %v1047
    %v1170 = vpack.c.b16 %v1050, %v1048
    %v1171 = vpack.c.b16 %v1053, %v1051
    %v1172 = vpack.c.b16 %v1054, %v1052
    %v1173 = vpack.c.b16 %v1057, %v1055
    %v1174 = vpack.c.b16 %v1058, %v1056
    %v1175 = vpack.c.b16 %v1061, %v1059
    %v1176 = vpack.c.b16 %v1062, %v1060
    %v1177 = vpack.c.b16 %v1065, %v1063
    %v1178 = vpack.c.b16 %v1066, %v1064
    %v1179 = vpack.c.b16 %v1069, %v1067
    %v1180 = vpack.c.b16 %v1070, %v1068
    %v1181 = vpack.c.b16 %v1073, %v1071
    %v1182 = vpack.c.b16 %v1074, %v1072
    %v1183 = vpack.c.b16 %v1077, %v1075
    %v1184 = vpack.c.b16 %v1078, %v1076
    %v1185 = vpack.c.b16 %v1081, %v1079
    %v1186 = vpack.c.b16 %v1082, %v1080
    %v1187 = vpack.c.b16 %v1085, %v1083
    %v1188 = vpack.c.b16 %v1086, %v1084
    %v1189 = vpack.c.b16 %v1089, %v1087
    %v1190 = vpack.c.b16 %v1090, %v1088
    %v1191 = vpack.c.b16 %v1093, %v1091
    %v1192 = vpack.c.b16 %v1094, %v1092
    %v1193 = vpack.c.b16 %v1097, %v1095
    %v1194 = vpack.c.b16 %v1098, %v1096
    %v1195 = vpack.c.b16 %v1101, %v1099
    %v1196 = vpack.c.b16 %v1102, %v1100
    %v1197 = vpack.c.b16 %v1105, %v1103
    %v1198 = vpack.c.b16 %v1106, %v1104
    %v1199 = vpack.c.b16 %v1109, %v1107
    %v1200 = vpack.c.b16 %v1110, %v1108
    %v1201 = vpack.c.b16 %v1113, %v1111
    %v1202 = vpack.c.b16 %v1114, %v1112
    %v1203 = vpack.c.b16 %v1117, %v1115
    %v1204 = vpack.c.b16 %v1118, %v1116
    %v1205 = vpack.c.b16 %v1121, %v1119
    %v1206 = vpack.c.b16 %v1122, %v1120
    %v1207 = vpack.c.b16 %v1125, %v1123
    %v1208 = vpack.c.b16 %v1126, %v1124
    %v1209 = vpack.c.b16 %v1129, %v1127
    %v1210 = vpack.c.b16 %v1130, %v1128
    %v1211 = vpack.c.b16 %v1133, %v1131
    %v1212 = vpack.c.b16 %v1134, %v1132
    %v1213 = vpack.c.b16 %v1137, %v1135
    %v1214 = vpack.c.b16 %v1138, %v1136
    %v1215 = vpack.c.b16 %v1141, %v1139
    %v1216 = vpack.c.b16 %v1142, %v1140
    %v1217 = vpack.c.b16 %v1145, %v1143
    %v1218 = vpack.c.b16 %v1146, %v1144
    %v1219 = vpack.c.b16 %v1149, %v1147
    %v1220 = vpack.c.b16 %v1150, %v1148
    %v1221 = vpack.c.b16 %v1153, %v1151
    %v1222 = vpack.c.b16 %v1154, %v1152
    %v1223 = vpack.c.b16 %v1157, %v1155
    %v1224 = vpack.c.b16 %v1158, %v1156
    %v1225 = vpack.c.b16 %v1161, %v1159
    %v1226 = vpack.c.b16 %v1162, %v1160
    %1291 = vmatprep.subr.bf16.mxu0 %v1178
    %1292 = vmatpush1.bf16.msra.mxu0 %v1177
    %1293 = vmatprep.subr.bf16.mxu0 %v1176
    %1294 = vmatpush1.bf16.msra.mxu0 %v1175
    %1295 = vmatprep.subr.bf16.mxu0 %v1174
    %1296 = vmatpush1.bf16.msra.mxu0 %v1173
    %1297 = vmatprep.subr.bf16.mxu0 %v1172
    %1298 = vmatpush1.bf16.msra.mxu0 %v1171
    %1299 = vmatprep.subr.bf16.mxu0 %v1170
    %1300 = vmatpush1.bf16.msra.mxu0 %v1169
    %1301 = vmatprep.subr.bf16.mxu0 %v1168
    %1302 = vmatpush1.bf16.msra.mxu0 %v1167
    %1303 = vmatprep.subr.bf16.mxu0 %v1166
    %1304 = vmatpush1.bf16.msra.mxu0 %v1165
    %1305 = vmatprep.subr.bf16.mxu0 %v1164
    %1306 = vmatpush1.bf16.msra.mxu0 %v1163
    %1307 = vmatprep.subr.bf16.mxu0 %v1194
    %1308 = vmatpush2.bf16.msra.mxu0 %v1193
    %1309 = vmatprep.subr.bf16.mxu0 %v1192
    %1310 = vmatpush2.bf16.msra.mxu0 %v1191
    %1311 = vmatprep.subr.bf16.mxu0 %v1190
    %1312 = vmatpush2.bf16.msra.mxu0 %v1189
    %1313 = vmatprep.subr.bf16.mxu0 %v1188
    %1314 = vmatpush2.bf16.msra.mxu0 %v1187
    %1315 = vmatprep.subr.bf16.mxu0 %v1186
    %1316 = vmatpush2.bf16.msra.mxu0 %v1185
    %1317 = vmatprep.subr.bf16.mxu0 %v1184
    %1318 = vmatpush2.bf16.msra.mxu0 %v1183
    %1319 = vmatprep.subr.bf16.mxu0 %v1182
    %1320 = vmatpush2.bf16.msra.mxu0 %v1181
    %1321 = vmatprep.subr.bf16.mxu0 %v1180
    %1322 = vmatpush2.bf16.msra.mxu0 %v1179
    %1323 = vmatprep.mubr.bf16.mxu0 %v892
    %1324 = vmatmul.mubr.bf16.gmra.mxu0 %v891
    %v1325 = vpop.f32.mrf.mxu0
    %v1326 = vadd.f32 %v964, %v1325
    %v1327 = vpop.f32.mrf.mxu0
    %v1328 = vadd.f32 %v968, %v1327
    %v1329 = vpop.f32.mrf.mxu0
    %v1330 = vadd.f32 %v964, %v1329
    %v1331 = vpop.f32.mrf.mxu0
    %v1332 = vadd.f32 %v968, %v1331
    %1333 = vdwg.mxu0
    %1334 = vmatprep.subr.bf16.mxu0 %v1210
    %1335 = vmatpush1.bf16.msra.mxu0 %v1209
    %1336 = vmatprep.subr.bf16.mxu0 %v1208
    %1337 = vmatpush1.bf16.msra.mxu0 %v1207
    %1338 = vmatprep.subr.bf16.mxu0 %v1206
    %1339 = vmatpush1.bf16.msra.mxu0 %v1205
    %1340 = vmatprep.subr.bf16.mxu0 %v1204
    %1341 = vmatpush1.bf16.msra.mxu0 %v1203
    %1342 = vmatprep.subr.bf16.mxu0 %v1202
    %1343 = vmatpush1.bf16.msra.mxu0 %v1201
    %1344 = vmatprep.subr.bf16.mxu0 %v1200
    %1345 = vmatpush1.bf16.msra.mxu0 %v1199
    %1346 = vmatprep.subr.bf16.mxu0 %v1198
    %1347 = vmatpush1.bf16.msra.mxu0 %v1197
    %1348 = vmatprep.subr.bf16.mxu0 %v1196
    %1349 = vmatpush1.bf16.msra.mxu0 %v1195
    %1350 = vmatprep.subr.bf16.mxu0 %v1226
    %1351 = vmatpush2.bf16.msra.mxu0 %v1225
    %1352 = vmatprep.subr.bf16.mxu0 %v1224
    %1353 = vmatpush2.bf16.msra.mxu0 %v1223
    %1354 = vmatprep.subr.bf16.mxu0 %v1222
    %1355 = vmatpush2.bf16.msra.mxu0 %v1221
    %1356 = vmatprep.subr.bf16.mxu0 %v1220
    %1357 = vmatpush2.bf16.msra.mxu0 %v1219
    %1358 = vmatprep.subr.bf16.mxu0 %v1218
    %1359 = vmatpush2.bf16.msra.mxu0 %v1217
    %1360 = vmatprep.subr.bf16.mxu0 %v1216
    %1361 = vmatpush2.bf16.msra.mxu0 %v1215
    %1362 = vmatprep.subr.bf16.mxu0 %v1214
    %1363 = vmatpush2.bf16.msra.mxu0 %v1213
    %1364 = vmatprep.subr.bf16.mxu0 %v1212
    %1365 = vmatpush2.bf16.msra.mxu0 %v1211
    %1366 = vmatprep.mubr.bf16.mxu0 %v894
    %1367 = vmatmul.mubr.bf16.gmra.mxu0 %v893
    %v1368 = vpop.f32.mrf.mxu0
    %v1369 = vadd.f32 %v1326, %v1368
    %v1370 = vpop.f32.mrf.mxu0
    %v1371 = vadd.f32 %v1328, %v1370
    %v1372 = vpop.f32.mrf.mxu0
    %v1373 = vadd.f32 %v1330, %v1372
    %v1374 = vpop.f32.mrf.mxu0
    %v1375 = vadd.f32 %v1332, %v1374
    %1376 = vdwg.mxu0
    %v1377 = vmul.f32 %v1371, 0.5
    %v1378 = vmul.f32 %v1375, 0.5
    %v1379 = vmul.f32 %v1377, 1.442695
    %v1380 = vpow.pop %v1379
    %v1381 = vmul.f32 %v1378, 1.442695
    %v1382 = vpow.pop %v1381
    %v1383 = vld [vmem:[%s1] sm:$0xf]
    %v1384 = vld [vmem:[%s1 + $0x4] sm:$0xf]
    %v1385 = vunpack.c.l.bf16 %v1383
    %v1386 = vunpack.c.l.bf16 %v1384
    %v1387 = vmul.f32 %v1385, %v1380
    %v1388 = vmul.f32 %v1386, %v1382
    %v1389 = vadd.f32 %v1369, %v1387
    %v1390 = vadd.f32 %v1373, %v1388
    %v1391 = vpack.c.bf16 %v1390, %v1389
    %v1392 = vld [vmem:[#allocation6] sm:$0xff]
    %v1393 = vld [vmem:[#allocation6 + $0x8] sm:$0xff]
    %v1394 = vld [vmem:[#allocation6 + $0x10] sm:$0xff]
    %v1395 = vld [vmem:[#allocation6 + $0x18] sm:$0xff]
    %v1396 = vld [vmem:[#allocation6 + $0x20] sm:$0xff]
    %v1397 = vld [vmem:[#allocation6 + $0x28] sm:$0xff]
    %v1398 = vld [vmem:[#allocation6 + $0x30] sm:$0xff]
    %v1399 = vld [vmem:[#allocation6 + $0x38] sm:$0xff]
    %v1400 = vld [vmem:[#allocation6 + $0x40] sm:$0xff]
    %v1401 = vld [vmem:[#allocation6 + $0x48] sm:$0xff]
    %v1402 = vld [vmem:[#allocation6 + $0x50] sm:$0xff]
    %v1403 = vld [vmem:[#allocation6 + $0x58] sm:$0xff]
    %v1404 = vld [vmem:[#allocation6 + $0x60] sm:$0xff]
    %v1405 = vld [vmem:[#allocation6 + $0x68] sm:$0xff]
    %v1406 = vld [vmem:[#allocation6 + $0x70] sm:$0xff]
    %v1407 = vld [vmem:[#allocation6 + $0x78] sm:$0xff]
    %v1408 = vld [vmem:[#allocation6 + $0x80] sm:$0xff]
    %v1409 = vld [vmem:[#allocation6 + $0x88] sm:$0xff]
    %v1410 = vld [vmem:[#allocation6 + $0x90] sm:$0xff]
    %v1411 = vld [vmem:[#allocation6 + $0x98] sm:$0xff]
    %v1412 = vld [vmem:[#allocation6 + $0xa0] sm:$0xff]
    %v1413 = vld [vmem:[#allocation6 + $0xa8] sm:$0xff]
    %v1414 = vld [vmem:[#allocation6 + $0xb0] sm:$0xff]
    %v1415 = vld [vmem:[#allocation6 + $0xb8] sm:$0xff]
    %v1416 = vld [vmem:[#allocation6 + $0xc0] sm:$0xff]
    %v1417 = vld [vmem:[#allocation6 + $0xc8] sm:$0xff]
    %v1418 = vld [vmem:[#allocation6 + $0xd0] sm:$0xff]
    %v1419 = vld [vmem:[#allocation6 + $0xd8] sm:$0xff]
    %v1420 = vld [vmem:[#allocation6 + $0xe0] sm:$0xff]
    %v1421 = vld [vmem:[#allocation6 + $0xe8] sm:$0xff]
    %v1422 = vld [vmem:[#allocation6 + $0xf0] sm:$0xff]
    %v1423 = vld [vmem:[#allocation6 + $0xf8] sm:$0xff]
    %v1424 = vld [vmem:[%s7] sm:$0xf]
    %v1426 = vlaneseq
    %v1427 = vshrl.u32 %v1426, 7
    %v1428 = vsub.s32 0, %v1427
    %v1429 = vrot.slane %v1424, %v1428
    %v1430 = vlaneseq
    %v1431 = vshrl.u32 %v1430, 7
    %v1432 = vsub.s32 1, %v1431
    %v1433 = vrot.slane %v1424, %v1432
    %v1434 = vlaneseq
    %v1435 = vshrl.u32 %v1434, 7
    %v1436 = vsub.s32 2, %v1435
    %v1437 = vrot.slane %v1424, %v1436
    %v1438 = vlaneseq
    %v1439 = vshrl.u32 %v1438, 7
    %v1440 = vsub.s32 3, %v1439
    %v1441 = vrot.slane %v1424, %v1440
    %v1478 = vunpack.c.l.b16 %v1392
    %v1479 = vunpack.c.h.b16 %v1392
    %v1480 = vunpack.c.l.b16 %v1393
    %v1481 = vunpack.c.h.b16 %v1393
    %v1482 = vunpack.c.l.b16 %v1394
    %v1483 = vunpack.c.h.b16 %v1394
    %v1484 = vunpack.c.l.b16 %v1395
    %v1485 = vunpack.c.h.b16 %v1395
    %v1486 = vunpack.c.l.b16 %v1396
    %v1487 = vunpack.c.h.b16 %v1396
    %v1488 = vunpack.c.l.b16 %v1397
    %v1489 = vunpack.c.h.b16 %v1397
    %v1490 = vunpack.c.l.b16 %v1398
    %v1491 = vunpack.c.h.b16 %v1398
    %v1492 = vunpack.c.l.b16 %v1399
    %v1493 = vunpack.c.h.b16 %v1399
    %v1494 = vunpack.c.l.b16 %v1400
    %v1495 = vunpack.c.h.b16 %v1400
    %v1496 = vunpack.c.l.b16 %v1401
    %v1497 = vunpack.c.h.b16 %v1401
    %v1498 = vunpack.c.l.b16 %v1402
    %v1499 = vunpack.c.h.b16 %v1402
    %v1500 = vunpack.c.l.b16 %v1403
    %v1501 = vunpack.c.h.b16 %v1403
    %v1502 = vunpack.c.l.b16 %v1404
    %v1503 = vunpack.c.h.b16 %v1404
    %v1504 = vunpack.c.l.b16 %v1405
    %v1505 = vunpack.c.h.b16 %v1405
    %v1506 = vunpack.c.l.b16 %v1406
    %v1507 = vunpack.c.h.b16 %v1406
    %v1508 = vunpack.c.l.b16 %v1407
    %v1509 = vunpack.c.h.b16 %v1407
    %v1510 = vunpack.c.l.b16 %v1408
    %v1511 = vunpack.c.h.b16 %v1408
    %v1512 = vunpack.c.l.b16 %v1409
    %v1513 = vunpack.c.h.b16 %v1409
    %v1514 = vunpack.c.l.b16 %v1410
    %v1515 = vunpack.c.h.b16 %v1410
    %v1516 = vunpack.c.l.b16 %v1411
    %v1517 = vunpack.c.h.b16 %v1411
    %v1518 = vunpack.c.l.b16 %v1412
    %v1519 = vunpack.c.h.b16 %v1412
    %v1520 = vunpack.c.l.b16 %v1413
    %v1521 = vunpack.c.h.b16 %v1413
    %v1522 = vunpack.c.l.b16 %v1414
    %v1523 = vunpack.c.h.b16 %v1414
    %v1524 = vunpack.c.l.b16 %v1415
    %v1525 = vunpack.c.h.b16 %v1415
    %v1526 = vunpack.c.l.b16 %v1416
    %v1527 = vunpack.c.h.b16 %v1416
    %v1528 = vunpack.c.l.b16 %v1417
    %v1529 = vunpack.c.h.b16 %v1417
    %v1530 = vunpack.c.l.b16 %v1418
    %v1531 = vunpack.c.h.b16 %v1418
    %v1532 = vunpack.c.l.b16 %v1419
    %v1533 = vunpack.c.h.b16 %v1419
    %v1534 = vunpack.c.l.b16 %v1420
    %v1535 = vunpack.c.h.b16 %v1420
    %v1536 = vunpack.c.l.b16 %v1421
    %v1537 = vunpack.c.h.b16 %v1421
    %v1538 = vunpack.c.l.b16 %v1422
    %v1539 = vunpack.c.h.b16 %v1422
    %v1540 = vunpack.c.l.b16 %v1423
    %v1541 = vunpack.c.h.b16 %v1423
    %v1542 = vpack.c.b16 %v1482, %v1478
    %v1543 = vpack.c.b16 %v1483, %v1479
    %v1544 = vpack.c.b16 %v1484, %v1480
    %v1545 = vpack.c.b16 %v1485, %v1481
    %v1546 = vpack.c.b16 %v1490, %v1486
    %v1547 = vpack.c.b16 %v1491, %v1487
    %v1548 = vpack.c.b16 %v1492, %v1488
    %v1549 = vpack.c.b16 %v1493, %v1489
    %v1550 = vpack.c.b16 %v1498, %v1494
    %v1551 = vpack.c.b16 %v1499, %v1495
    %v1552 = vpack.c.b16 %v1500, %v1496
    %v1553 = vpack.c.b16 %v1501, %v1497
    %v1554 = vpack.c.b16 %v1506, %v1502
    %v1555 = vpack.c.b16 %v1507, %v1503
    %v1556 = vpack.c.b16 %v1508, %v1504
    %v1557 = vpack.c.b16 %v1509, %v1505
    %v1558 = vpack.c.b16 %v1514, %v1510
    %v1559 = vpack.c.b16 %v1515, %v1511
    %v1560 = vpack.c.b16 %v1516, %v1512
    %v1561 = vpack.c.b16 %v1517, %v1513
    %v1562 = vpack.c.b16 %v1522, %v1518
    %v1563 = vpack.c.b16 %v1523, %v1519
    %v1564 = vpack.c.b16 %v1524, %v1520
    %v1565 = vpack.c.b16 %v1525, %v1521
    %v1566 = vpack.c.b16 %v1530, %v1526
    %v1567 = vpack.c.b16 %v1531, %v1527
    %v1568 = vpack.c.b16 %v1532, %v1528
    %v1569 = vpack.c.b16 %v1533, %v1529
    %v1570 = vpack.c.b16 %v1538, %v1534
    %v1571 = vpack.c.b16 %v1539, %v1535
    %v1572 = vpack.c.b16 %v1540, %v1536
    %v1573 = vpack.c.b16 %v1541, %v1537
    %1606 = vmatprep.subr.bf16.mxu0 %v1571
    %1607 = vmatpush1.bf16.msra.mxu0 %v1570
    %1608 = vmatprep.subr.bf16.mxu0 %v1567
    %1609 = vmatpush1.bf16.msra.mxu0 %v1566
    %1610 = vmatprep.subr.bf16.mxu0 %v1563
    %1611 = vmatpush1.bf16.msra.mxu0 %v1562
    %1612 = vmatprep.subr.bf16.mxu0 %v1559
    %1613 = vmatpush1.bf16.msra.mxu0 %v1558
    %1614 = vmatprep.subr.bf16.mxu0 %v1555
    %1615 = vmatpush1.bf16.msra.mxu0 %v1554
    %1616 = vmatprep.subr.bf16.mxu0 %v1551
    %1617 = vmatpush1.bf16.msra.mxu0 %v1550
    %1618 = vmatprep.subr.bf16.mxu0 %v1547
    %1619 = vmatpush1.bf16.msra.mxu0 %v1546
    %1620 = vmatprep.subr.bf16.mxu0 %v1543
    %1621 = vmatpush1.bf16.msra.mxu0 %v1542
    %1622 = vmatprep.subr.bf16.mxu0 0
    %1623 = vmatpush2.bf16.msra.mxu0 0
    %1624 = vmatprep.subr.bf16.mxu0 0
    %1625 = vmatpush2.bf16.msra.mxu0 0
    %1626 = vmatprep.subr.bf16.mxu0 0
    %1627 = vmatpush2.bf16.msra.mxu0 0
    %1628 = vmatprep.subr.bf16.mxu0 0
    %1629 = vmatpush2.bf16.msra.mxu0 0
    %1630 = vmatprep.subr.bf16.mxu0 0
    %1631 = vmatpush2.bf16.msra.mxu0 0
    %1632 = vmatprep.subr.bf16.mxu0 0
    %1633 = vmatpush2.bf16.msra.mxu0 0
    %1634 = vmatprep.subr.bf16.mxu0 0
    %1635 = vmatpush2.bf16.msra.mxu0 0
    %1636 = vmatprep.subr.bf16.mxu0 0
    %1637 = vmatpush2.bf16.msra.mxu0 0
    %1638 = vmatprep.mubr.bf16.mxu0 0
    %1639 = vmatmul.mubr.bf16.gmra.mxu0 %v1391
    %v1640 = vpop.f32.mrf.mxu0
    %v1641 = vadd.f32 %v1429, %v1640
    %v1642 = vpop.f32.mrf.mxu0
    %v1643 = vadd.f32 %v1433, %v1642
    %v1644 = vpop.f32.mrf.mxu0
    %v1645 = vadd.f32 %v1429, %v1644
    %v1646 = vpop.f32.mrf.mxu0
    %v1647 = vadd.f32 %v1433, %v1646
    %1648 = vdwg.mxu0
    %1649 = vmatprep.subr.bf16.mxu0 %v1573
    %1650 = vmatpush1.bf16.msra.mxu0 %v1572
    %1651 = vmatprep.subr.bf16.mxu0 %v1569
    %1652 = vmatpush1.bf16.msra.mxu0 %v1568
    %1653 = vmatprep.subr.bf16.mxu0 %v1565
    %1654 = vmatpush1.bf16.msra.mxu0 %v1564
    %1655 = vmatprep.subr.bf16.mxu0 %v1561
    %1656 = vmatpush1.bf16.msra.mxu0 %v1560
    %1657 = vmatprep.subr.bf16.mxu0 %v1557
    %1658 = vmatpush1.bf16.msra.mxu0 %v1556
    %1659 = vmatprep.subr.bf16.mxu0 %v1553
    %1660 = vmatpush1.bf16.msra.mxu0 %v1552
    %1661 = vmatprep.subr.bf16.mxu0 %v1549
    %1662 = vmatpush1.bf16.msra.mxu0 %v1548
    %1663 = vmatprep.subr.bf16.mxu0 %v1545
    %1664 = vmatpush1.bf16.msra.mxu0 %v1544
    %1665 = vmatprep.subr.bf16.mxu0 0
    %1666 = vmatpush2.bf16.msra.mxu0 0
    %1667 = vmatprep.subr.bf16.mxu0 0
    %1668 = vmatpush2.bf16.msra.mxu0 0
    %1669 = vmatprep.subr.bf16.mxu0 0
    %1670 = vmatpush2.bf16.msra.mxu0 0
    %1671 = vmatprep.subr.bf16.mxu0 0
    %1672 = vmatpush2.bf16.msra.mxu0 0
    %1673 = vmatprep.subr.bf16.mxu0 0
    %1674 = vmatpush2.bf16.msra.mxu0 0
    %1675 = vmatprep.subr.bf16.mxu0 0
    %1676 = vmatpush2.bf16.msra.mxu0 0
    %1677 = vmatprep.subr.bf16.mxu0 0
    %1678 = vmatpush2.bf16.msra.mxu0 0
    %1679 = vmatprep.subr.bf16.mxu0 0
    %1680 = vmatpush2.bf16.msra.mxu0 0
    %1681 = vmatprep.mubr.bf16.mxu0 0
    %1682 = vmatmul.mubr.bf16.gmra.mxu0 %v1391
    %v1683 = vpop.f32.mrf.mxu0
    %v1684 = vadd.f32 %v1437, %v1683
    %v1685 = vpop.f32.mrf.mxu0
    %v1686 = vadd.f32 %v1441, %v1685
    %v1687 = vpop.f32.mrf.mxu0
    %v1688 = vadd.f32 %v1437, %v1687
    %v1689 = vpop.f32.mrf.mxu0
    %v1690 = vadd.f32 %v1441, %v1689
    %1691 = vdwg.mxu0
    %v1692 = vmax.f32 %v1641, 0.0
    %v1693 = vmax.f32 %v1643, 0.0
    %v1694 = vmax.f32 %v1684, 0.0
    %v1695 = vmax.f32 %v1686, 0.0
    %v1696 = vmax.f32 %v1645, 0.0
    %v1697 = vmax.f32 %v1647, 0.0
    %v1698 = vmax.f32 %v1688, 0.0
    %v1699 = vmax.f32 %v1690, 0.0
    %v1700 = vpack.c.bf16 %v1696, %v1692
    %v1701 = vpack.c.bf16 %v1697, %v1693
    %v1702 = vpack.c.bf16 %v1698, %v1694
    %v1703 = vpack.c.bf16 %v1699, %v1695
    %v1704 = vld [vmem:[#allocation7] sm:$0xff]
    %v1705 = vld [vmem:[#allocation7 + $0x8] sm:$0xf]
    %v1706 = vld [vmem:[#allocation7 + $0xc] sm:$0xff]
    %v1707 = vld [vmem:[#allocation7 + $0x14] sm:$0xf]
    %v1708 = vld [vmem:[#allocation7 + $0x18] sm:$0xff]
    %v1709 = vld [vmem:[#allocation7 + $0x20] sm:$0xf]
    %v1710 = vld [vmem:[#allocation7 + $0x24] sm:$0xff]
    %v1711 = vld [vmem:[#allocation7 + $0x2c] sm:$0xf]
    %v1712 = vld [vmem:[#allocation7 + $0x30] sm:$0xff]
    %v1713 = vld [vmem:[#allocation7 + $0x38] sm:$0xf]
    %v1714 = vld [vmem:[#allocation7 + $0x3c] sm:$0xff]
    %v1715 = vld [vmem:[#allocation7 + $0x44] sm:$0xf]
    %v1716 = vld [vmem:[#allocation7 + $0x48] sm:$0xff]
    %v1717 = vld [vmem:[#allocation7 + $0x50] sm:$0xf]
    %v1718 = vld [vmem:[#allocation7 + $0x54] sm:$0xff]
    %v1719 = vld [vmem:[#allocation7 + $0x5c] sm:$0xf]
    %v1720 = vld [vmem:[#allocation7 + $0x60] sm:$0xff]
    %v1721 = vld [vmem:[#allocation7 + $0x68] sm:$0xf]
    %v1722 = vld [vmem:[#allocation7 + $0x6c] sm:$0xff]
    %v1723 = vld [vmem:[#allocation7 + $0x74] sm:$0xf]
    %v1724 = vld [vmem:[#allocation7 + $0x78] sm:$0xff]
    %v1725 = vld [vmem:[#allocation7 + $0x80] sm:$0xf]
    %v1726 = vld [vmem:[#allocation7 + $0x84] sm:$0xff]
    %v1727 = vld [vmem:[#allocation7 + $0x8c] sm:$0xf]
    %v1728 = vld [vmem:[#allocation7 + $0x90] sm:$0xff]
    %v1729 = vld [vmem:[#allocation7 + $0x98] sm:$0xf]
    %v1730 = vld [vmem:[#allocation7 + $0x9c] sm:$0xff]
    %v1731 = vld [vmem:[#allocation7 + $0xa4] sm:$0xf]
    %v1732 = vld [vmem:[#allocation7 + $0xa8] sm:$0xff]
    %v1733 = vld [vmem:[#allocation7 + $0xb0] sm:$0xf]
    %v1734 = vld [vmem:[#allocation7 + $0xb4] sm:$0xff]
    %v1735 = vld [vmem:[#allocation7 + $0xbc] sm:$0xf]
    %v1736 = vld [vmem:[#allocation7 + $0xc0] sm:$0xff]
    %v1737 = vld [vmem:[#allocation7 + $0xc8] sm:$0xf]
    %v1738 = vld [vmem:[#allocation7 + $0xcc] sm:$0xff]
    %v1739 = vld [vmem:[#allocation7 + $0xd4] sm:$0xf]
    %v1740 = vld [vmem:[#allocation7 + $0xd8] sm:$0xff]
    %v1741 = vld [vmem:[#allocation7 + $0xe0] sm:$0xf]
    %v1742 = vld [vmem:[#allocation7 + $0xe4] sm:$0xff]
    %v1743 = vld [vmem:[#allocation7 + $0xec] sm:$0xf]
    %v1744 = vld [vmem:[#allocation7 + $0xf0] sm:$0xff]
    %v1745 = vld [vmem:[#allocation7 + $0xf8] sm:$0xf]
    %v1746 = vld [vmem:[#allocation7 + $0xfc] sm:$0xff]
    %v1747 = vld [vmem:[#allocation7 + $0x104] sm:$0xf]
    %v1748 = vld [vmem:[#allocation7 + $0x108] sm:$0xff]
    %v1749 = vld [vmem:[#allocation7 + $0x110] sm:$0xf]
    %v1750 = vld [vmem:[#allocation7 + $0x114] sm:$0xff]
    %v1751 = vld [vmem:[#allocation7 + $0x11c] sm:$0xf]
    %v1752 = vld [vmem:[#allocation7 + $0x120] sm:$0xff]
    %v1753 = vld [vmem:[#allocation7 + $0x128] sm:$0xf]
    %v1754 = vld [vmem:[#allocation7 + $0x12c] sm:$0xff]
    %v1755 = vld [vmem:[#allocation7 + $0x134] sm:$0xf]
    %v1756 = vld [vmem:[#allocation7 + $0x138] sm:$0xff]
    %v1757 = vld [vmem:[#allocation7 + $0x140] sm:$0xf]
    %v1758 = vld [vmem:[#allocation7 + $0x144] sm:$0xff]
    %v1759 = vld [vmem:[#allocation7 + $0x14c] sm:$0xf]
    %v1760 = vld [vmem:[#allocation7 + $0x150] sm:$0xff]
    %v1761 = vld [vmem:[#allocation7 + $0x158] sm:$0xf]
    %v1762 = vld [vmem:[#allocation7 + $0x15c] sm:$0xff]
    %v1763 = vld [vmem:[#allocation7 + $0x164] sm:$0xf]
    %v1764 = vld [vmem:[#allocation7 + $0x168] sm:$0xff]
    %v1765 = vld [vmem:[#allocation7 + $0x170] sm:$0xf]
    %v1766 = vld [vmem:[#allocation7 + $0x174] sm:$0xff]
    %v1767 = vld [vmem:[#allocation7 + $0x17c] sm:$0xf]
    %v1768 = vld [vmem:[#allocation7 + $0x180] sm:$0xff]
    %v1769 = vld [vmem:[#allocation7 + $0x188] sm:$0xf]
    %v1770 = vld [vmem:[#allocation7 + $0x18c] sm:$0xff]
    %v1771 = vld [vmem:[#allocation7 + $0x194] sm:$0xf]
    %v1772 = vld [vmem:[#allocation7 + $0x198] sm:$0xff]
    %v1773 = vld [vmem:[#allocation7 + $0x1a0] sm:$0xf]
    %v1774 = vld [vmem:[#allocation7 + $0x1a4] sm:$0xff]
    %v1775 = vld [vmem:[#allocation7 + $0x1ac] sm:$0xf]
    %v1776 = vld [vmem:[#allocation7 + $0x1b0] sm:$0xff]
    %v1777 = vld [vmem:[#allocation7 + $0x1b8] sm:$0xf]
    %v1778 = vld [vmem:[#allocation7 + $0x1bc] sm:$0xff]
    %v1779 = vld [vmem:[#allocation7 + $0x1c4] sm:$0xf]
    %v1780 = vld [vmem:[#allocation7 + $0x1c8] sm:$0xff]
    %v1781 = vld [vmem:[#allocation7 + $0x1d0] sm:$0xf]
    %v1782 = vld [vmem:[#allocation7 + $0x1d4] sm:$0xff]
    %v1783 = vld [vmem:[#allocation7 + $0x1dc] sm:$0xf]
    %v1784 = vld [vmem:[#allocation7 + $0x1e0] sm:$0xff]
    %v1785 = vld [vmem:[#allocation7 + $0x1e8] sm:$0xf]
    %v1786 = vld [vmem:[#allocation7 + $0x1ec] sm:$0xff]
    %v1787 = vld [vmem:[#allocation7 + $0x1f4] sm:$0xf]
    %v1788 = vld [vmem:[#allocation7 + $0x1f8] sm:$0xff]
    %v1789 = vld [vmem:[#allocation7 + $0x200] sm:$0xf]
    %v1790 = vld [vmem:[#allocation7 + $0x204] sm:$0xff]
    %v1791 = vld [vmem:[#allocation7 + $0x20c] sm:$0xf]
    %v1792 = vld [vmem:[#allocation7 + $0x210] sm:$0xff]
    %v1793 = vld [vmem:[#allocation7 + $0x218] sm:$0xf]
    %v1794 = vld [vmem:[#allocation7 + $0x21c] sm:$0xff]
    %v1795 = vld [vmem:[#allocation7 + $0x224] sm:$0xf]
    %v1796 = vld [vmem:[#allocation7 + $0x228] sm:$0xff]
    %v1797 = vld [vmem:[#allocation7 + $0x230] sm:$0xf]
    %v1798 = vld [vmem:[#allocation7 + $0x234] sm:$0xff]
    %v1799 = vld [vmem:[#allocation7 + $0x23c] sm:$0xf]
    %v1800 = vld [vmem:[#allocation7 + $0x240] sm:$0xff]
    %v1801 = vld [vmem:[#allocation7 + $0x248] sm:$0xf]
    %v1802 = vld [vmem:[#allocation7 + $0x24c] sm:$0xff]
    %v1803 = vld [vmem:[#allocation7 + $0x254] sm:$0xf]
    %v1804 = vld [vmem:[#allocation7 + $0x258] sm:$0xff]
    %v1805 = vld [vmem:[#allocation7 + $0x260] sm:$0xf]
    %v1806 = vld [vmem:[#allocation7 + $0x264] sm:$0xff]
    %v1807 = vld [vmem:[#allocation7 + $0x26c] sm:$0xf]
    %v1808 = vld [vmem:[#allocation7 + $0x270] sm:$0xff]
    %v1809 = vld [vmem:[#allocation7 + $0x278] sm:$0xf]
    %v1810 = vld [vmem:[#allocation7 + $0x27c] sm:$0xff]
    %v1811 = vld [vmem:[#allocation7 + $0x284] sm:$0xf]
    %v1812 = vld [vmem:[#allocation7 + $0x288] sm:$0xff]
    %v1813 = vld [vmem:[#allocation7 + $0x290] sm:$0xf]
    %v1814 = vld [vmem:[#allocation7 + $0x294] sm:$0xff]
    %v1815 = vld [vmem:[#allocation7 + $0x29c] sm:$0xf]
    %v1816 = vld [vmem:[#allocation7 + $0x2a0] sm:$0xff]
    %v1817 = vld [vmem:[#allocation7 + $0x2a8] sm:$0xf]
    %v1818 = vld [vmem:[#allocation7 + $0x2ac] sm:$0xff]
    %v1819 = vld [vmem:[#allocation7 + $0x2b4] sm:$0xf]
    %v1820 = vld [vmem:[#allocation7 + $0x2b8] sm:$0xff]
    %v1821 = vld [vmem:[#allocation7 + $0x2c0] sm:$0xf]
    %v1822 = vld [vmem:[#allocation7 + $0x2c4] sm:$0xff]
    %v1823 = vld [vmem:[#allocation7 + $0x2cc] sm:$0xf]
    %v1824 = vld [vmem:[#allocation7 + $0x2d0] sm:$0xff]
    %v1825 = vld [vmem:[#allocation7 + $0x2d8] sm:$0xf]
    %v1826 = vld [vmem:[#allocation7 + $0x2dc] sm:$0xff]
    %v1827 = vld [vmem:[#allocation7 + $0x2e4] sm:$0xf]
    %v1828 = vld [vmem:[#allocation7 + $0x2e8] sm:$0xff]
    %v1829 = vld [vmem:[#allocation7 + $0x2f0] sm:$0xf]
    %v1830 = vld [vmem:[#allocation7 + $0x2f4] sm:$0xff]
    %v1831 = vld [vmem:[#allocation7 + $0x2fc] sm:$0xf]
    %v1832 = vld [vmem:[%s9] sm:$0x7]
    %v1834 = vlaneseq
    %v1835 = vshrl.u32 %v1834, 7
    %v1836 = vsub.s32 0, %v1835
    %v1837 = vrot.slane %v1832, %v1836
    %v1838 = vlaneseq
    %v1839 = vshrl.u32 %v1838, 7
    %v1840 = vsub.s32 1, %v1839
    %v1841 = vrot.slane %v1832, %v1840
    %v1842 = vlaneseq
    %v1843 = vshrl.u32 %v1842, 7
    %v1844 = vsub.s32 2, %v1843
    %v1845 = vrot.slane %v1832, %v1844
    %v1977 = vunpack.c.l.b16 %v1704
    %v1978 = vunpack.c.h.b16 %v1704
    %v1979 = vunpack.c.l.b16 %v1705
    %v1980 = vunpack.c.l.b16 %v1706
    %v1981 = vunpack.c.h.b16 %v1706
    %v1982 = vunpack.c.l.b16 %v1707
    %v1983 = vunpack.c.l.b16 %v1708
    %v1984 = vunpack.c.h.b16 %v1708
    %v1985 = vunpack.c.l.b16 %v1709
    %v1986 = vunpack.c.l.b16 %v1710
    %v1987 = vunpack.c.h.b16 %v1710
    %v1988 = vunpack.c.l.b16 %v1711
    %v1989 = vunpack.c.l.b16 %v1712
    %v1990 = vunpack.c.h.b16 %v1712
    %v1991 = vunpack.c.l.b16 %v1713
    %v1992 = vunpack.c.l.b16 %v1714
    %v1993 = vunpack.c.h.b16 %v1714
    %v1994 = vunpack.c.l.b16 %v1715
    %v1995 = vunpack.c.l.b16 %v1716
    %v1996 = vunpack.c.h.b16 %v1716
    %v1997 = vunpack.c.l.b16 %v1717
    %v1998 = vunpack.c.l.b16 %v1718
    %v1999 = vunpack.c.h.b16 %v1718
    %v2000 = vunpack.c.l.b16 %v1719
    %v2001 = vunpack.c.l.b16 %v1720
    %v2002 = vunpack.c.h.b16 %v1720
    %v2003 = vunpack.c.l.b16 %v1721
    %v2004 = vunpack.c.l.b16 %v1722
    %v2005 = vunpack.c.h.b16 %v1722
    %v2006 = vunpack.c.l.b16 %v1723
    %v2007 = vunpack.c.l.b16 %v1724
    %v2008 = vunpack.c.h.b16 %v1724
    %v2009 = vunpack.c.l.b16 %v1725
    %v2010 = vunpack.c.l.b16 %v1726
    %v2011 = vunpack.c.h.b16 %v1726
    %v2012 = vunpack.c.l.b16 %v1727
    %v2013 = vunpack.c.l.b16 %v1728
    %v2014 = vunpack.c.h.b16 %v1728
    %v2015 = vunpack.c.l.b16 %v1729
    %v2016 = vunpack.c.l.b16 %v1730
    %v2017 = vunpack.c.h.b16 %v1730
    %v2018 = vunpack.c.l.b16 %v1731
    %v2019 = vunpack.c.l.b16 %v1732
    %v2020 = vunpack.c.h.b16 %v1732
    %v2021 = vunpack.c.l.b16 %v1733
    %v2022 = vunpack.c.l.b16 %v1734
    %v2023 = vunpack.c.h.b16 %v1734
    %v2024 = vunpack.c.l.b16 %v1735
    %v2025 = vunpack.c.l.b16 %v1736
    %v2026 = vunpack.c.h.b16 %v1736
    %v2027 = vunpack.c.l.b16 %v1737
    %v2028 = vunpack.c.l.b16 %v1738
    %v2029 = vunpack.c.h.b16 %v1738
    %v2030 = vunpack.c.l.b16 %v1739
    %v2031 = vunpack.c.l.b16 %v1740
    %v2032 = vunpack.c.h.b16 %v1740
    %v2033 = vunpack.c.l.b16 %v1741
    %v2034 = vunpack.c.l.b16 %v1742
    %v2035 = vunpack.c.h.b16 %v1742
    %v2036 = vunpack.c.l.b16 %v1743
    %v2037 = vunpack.c.l.b16 %v1744
    %v2038 = vunpack.c.h.b16 %v1744
    %v2039 = vunpack.c.l.b16 %v1745
    %v2040 = vunpack.c.l.b16 %v1746
    %v2041 = vunpack.c.h.b16 %v1746
    %v2042 = vunpack.c.l.b16 %v1747
    %v2043 = vunpack.c.l.b16 %v1748
    %v2044 = vunpack.c.h.b16 %v1748
    %v2045 = vunpack.c.l.b16 %v1749
    %v2046 = vunpack.c.l.b16 %v1750
    %v2047 = vunpack.c.h.b16 %v1750
    %v2048 = vunpack.c.l.b16 %v1751
    %v2049 = vunpack.c.l.b16 %v1752
    %v2050 = vunpack.c.h.b16 %v1752
    %v2051 = vunpack.c.l.b16 %v1753
    %v2052 = vunpack.c.l.b16 %v1754
    %v2053 = vunpack.c.h.b16 %v1754
    %v2054 = vunpack.c.l.b16 %v1755
    %v2055 = vunpack.c.l.b16 %v1756
    %v2056 = vunpack.c.h.b16 %v1756
    %v2057 = vunpack.c.l.b16 %v1757
    %v2058 = vunpack.c.l.b16 %v1758
    %v2059 = vunpack.c.h.b16 %v1758
    %v2060 = vunpack.c.l.b16 %v1759
    %v2061 = vunpack.c.l.b16 %v1760
    %v2062 = vunpack.c.h.b16 %v1760
    %v2063 = vunpack.c.l.b16 %v1761
    %v2064 = vunpack.c.l.b16 %v1762
    %v2065 = vunpack.c.h.b16 %v1762
    %v2066 = vunpack.c.l.b16 %v1763
    %v2067 = vunpack.c.l.b16 %v1764
    %v2068 = vunpack.c.h.b16 %v1764
    %v2069 = vunpack.c.l.b16 %v1765
    %v2070 = vunpack.c.l.b16 %v1766
    %v2071 = vunpack.c.h.b16 %v1766
    %v2072 = vunpack.c.l.b16 %v1767
    %v2073 = vunpack.c.l.b16 %v1768
    %v2074 = vunpack.c.h.b16 %v1768
    %v2075 = vunpack.c.l.b16 %v1769
    %v2076 = vunpack.c.l.b16 %v1770
    %v2077 = vunpack.c.h.b16 %v1770
    %v2078 = vunpack.c.l.b16 %v1771
    %v2079 = vunpack.c.l.b16 %v1772
    %v2080 = vunpack.c.h.b16 %v1772
    %v2081 = vunpack.c.l.b16 %v1773
    %v2082 = vunpack.c.l.b16 %v1774
    %v2083 = vunpack.c.h.b16 %v1774
    %v2084 = vunpack.c.l.b16 %v1775
    %v2085 = vunpack.c.l.b16 %v1776
    %v2086 = vunpack.c.h.b16 %v1776
    %v2087 = vunpack.c.l.b16 %v1777
    %v2088 = vunpack.c.l.b16 %v1778
    %v2089 = vunpack.c.h.b16 %v1778
    %v2090 = vunpack.c.l.b16 %v1779
    %v2091 = vunpack.c.l.b16 %v1780
    %v2092 = vunpack.c.h.b16 %v1780
    %v2093 = vunpack.c.l.b16 %v1781
    %v2094 = vunpack.c.l.b16 %v1782
    %v2095 = vunpack.c.h.b16 %v1782
    %v2096 = vunpack.c.l.b16 %v1783
    %v2097 = vunpack.c.l.b16 %v1784
    %v2098 = vunpack.c.h.b16 %v1784
    %v2099 = vunpack.c.l.b16 %v1785
    %v2100 = vunpack.c.l.b16 %v1786
    %v2101 = vunpack.c.h.b16 %v1786
    %v2102 = vunpack.c.l.b16 %v1787
    %v2103 = vunpack.c.l.b16 %v1788
    %v2104 = vunpack.c.h.b16 %v1788
    %v2105 = vunpack.c.l.b16 %v1789
    %v2106 = vunpack.c.l.b16 %v1790
    %v2107 = vunpack.c.h.b16 %v1790
    %v2108 = vunpack.c.l.b16 %v1791
    %v2109 = vunpack.c.l.b16 %v1792
    %v2110 = vunpack.c.h.b16 %v1792
    %v2111 = vunpack.c.l.b16 %v1793
    %v2112 = vunpack.c.l.b16 %v1794
    %v2113 = vunpack.c.h.b16 %v1794
    %v2114 = vunpack.c.l.b16 %v1795
    %v2115 = vunpack.c.l.b16 %v1796
    %v2116 = vunpack.c.h.b16 %v1796
    %v2117 = vunpack.c.l.b16 %v1797
    %v2118 = vunpack.c.l.b16 %v1798
    %v2119 = vunpack.c.h.b16 %v1798
    %v2120 = vunpack.c.l.b16 %v1799
    %v2121 = vunpack.c.l.b16 %v1800
    %v2122 = vunpack.c.h.b16 %v1800
    %v2123 = vunpack.c.l.b16 %v1801
    %v2124 = vunpack.c.l.b16 %v1802
    %v2125 = vunpack.c.h.b16 %v1802
    %v2126 = vunpack.c.l.b16 %v1803
    %v2127 = vunpack.c.l.b16 %v1804
    %v2128 = vunpack.c.h.b16 %v1804
    %v2129 = vunpack.c.l.b16 %v1805
    %v2130 = vunpack.c.l.b16 %v1806
    %v2131 = vunpack.c.h.b16 %v1806
    %v2132 = vunpack.c.l.b16 %v1807
    %v2133 = vunpack.c.l.b16 %v1808
    %v2134 = vunpack.c.h.b16 %v1808
    %v2135 = vunpack.c.l.b16 %v1809
    %v2136 = vunpack.c.l.b16 %v1810
    %v2137 = vunpack.c.h.b16 %v1810
    %v2138 = vunpack.c.l.b16 %v1811
    %v2139 = vunpack.c.l.b16 %v1812
    %v2140 = vunpack.c.h.b16 %v1812
    %v2141 = vunpack.c.l.b16 %v1813
    %v2142 = vunpack.c.l.b16 %v1814
    %v2143 = vunpack.c.h.b16 %v1814
    %v2144 = vunpack.c.l.b16 %v1815
    %v2145 = vunpack.c.l.b16 %v1816
    %v2146 = vunpack.c.h.b16 %v1816
    %v2147 = vunpack.c.l.b16 %v1817
    %v2148 = vunpack.c.l.b16 %v1818
    %v2149 = vunpack.c.h.b16 %v1818
    %v2150 = vunpack.c.l.b16 %v1819
    %v2151 = vunpack.c.l.b16 %v1820
    %v2152 = vunpack.c.h.b16 %v1820
    %v2153 = vunpack.c.l.b16 %v1821
    %v2154 = vunpack.c.l.b16 %v1822
    %v2155 = vunpack.c.h.b16 %v1822
    %v2156 = vunpack.c.l.b16 %v1823
    %v2157 = vunpack.c.l.b16 %v1824
    %v2158 = vunpack.c.h.b16 %v1824
    %v2159 = vunpack.c.l.b16 %v1825
    %v2160 = vunpack.c.l.b16 %v1826
    %v2161 = vunpack.c.h.b16 %v1826
    %v2162 = vunpack.c.l.b16 %v1827
    %v2163 = vunpack.c.l.b16 %v1828
    %v2164 = vunpack.c.h.b16 %v1828
    %v2165 = vunpack.c.l.b16 %v1829
    %v2166 = vunpack.c.l.b16 %v1830
    %v2167 = vunpack.c.h.b16 %v1830
    %v2168 = vunpack.c.l.b16 %v1831
    %v2169 = vpack.c.b16 %v1980, %v1977
    %v2170 = vpack.c.b16 %v1981, %v1978
    %v2171 = vpack.c.b16 %v1982, %v1979
    %v2172 = vpack.c.b16 %v1986, %v1983
    %v2173 = vpack.c.b16 %v1987, %v1984
    %v2174 = vpack.c.b16 %v1988, %v1985
    %v2175 = vpack.c.b16 %v1992, %v1989
    %v2176 = vpack.c.b16 %v1993, %v1990
    %v2177 = vpack.c.b16 %v1994, %v1991
    %v2178 = vpack.c.b16 %v1998, %v1995
    %v2179 = vpack.c.b16 %v1999, %v1996
    %v2180 = vpack.c.b16 %v2000, %v1997
    %v2181 = vpack.c.b16 %v2004, %v2001
    %v2182 = vpack.c.b16 %v2005, %v2002
    %v2183 = vpack.c.b16 %v2006, %v2003
    %v2184 = vpack.c.b16 %v2010, %v2007
    %v2185 = vpack.c.b16 %v2011, %v2008
    %v2186 = vpack.c.b16 %v2012, %v2009
    %v2187 = vpack.c.b16 %v2016, %v2013
    %v2188 = vpack.c.b16 %v2017, %v2014
    %v2189 = vpack.c.b16 %v2018, %v2015
    %v2190 = vpack.c.b16 %v2022, %v2019
    %v2191 = vpack.c.b16 %v2023, %v2020
    %v2192 = vpack.c.b16 %v2024, %v2021
    %v2193 = vpack.c.b16 %v2028, %v2025
    %v2194 = vpack.c.b16 %v2029, %v2026
    %v2195 = vpack.c.b16 %v2030, %v2027
    %v2196 = vpack.c.b16 %v2034, %v2031
    %v2197 = vpack.c.b16 %v2035, %v2032
    %v2198 = vpack.c.b16 %v2036, %v2033
    %v2199 = vpack.c.b16 %v2040, %v2037
    %v2200 = vpack.c.b16 %v2041, %v2038
    %v2201 = vpack.c.b16 %v2042, %v2039
    %v2202 = vpack.c.b16 %v2046, %v2043
    %v2203 = vpack.c.b16 %v2047, %v2044
    %v2204 = vpack.c.b16 %v2048, %v2045
    %v2205 = vpack.c.b16 %v2052, %v2049
    %v2206 = vpack.c.b16 %v2053, %v2050
    %v2207 = vpack.c.b16 %v2054, %v2051
    %v2208 = vpack.c.b16 %v2058, %v2055
    %v2209 = vpack.c.b16 %v2059, %v2056
    %v2210 = vpack.c.b16 %v2060, %v2057
    %v2211 = vpack.c.b16 %v2064, %v2061
    %v2212 = vpack.c.b16 %v2065, %v2062
    %v2213 = vpack.c.b16 %v2066, %v2063
    %v2214 = vpack.c.b16 %v2070, %v2067
    %v2215 = vpack.c.b16 %v2071, %v2068
    %v2216 = vpack.c.b16 %v2072, %v2069
    %v2217 = vpack.c.b16 %v2076, %v2073
    %v2218 = vpack.c.b16 %v2077, %v2074
    %v2219 = vpack.c.b16 %v2078, %v2075
    %v2220 = vpack.c.b16 %v2082, %v2079
    %v2221 = vpack.c.b16 %v2083, %v2080
    %v2222 = vpack.c.b16 %v2084, %v2081
    %v2223 = vpack.c.b16 %v2088, %v2085
    %v2224 = vpack.c.b16 %v2089, %v2086
    %v2225 = vpack.c.b16 %v2090, %v2087
    %v2226 = vpack.c.b16 %v2094, %v2091
    %v2227 = vpack.c.b16 %v2095, %v2092
    %v2228 = vpack.c.b16 %v2096, %v2093
    %v2229 = vpack.c.b16 %v2100, %v2097
    %v2230 = vpack.c.b16 %v2101, %v2098
    %v2231 = vpack.c.b16 %v2102, %v2099
    %v2232 = vpack.c.b16 %v2106, %v2103
    %v2233 = vpack.c.b16 %v2107, %v2104
    %v2234 = vpack.c.b16 %v2108, %v2105
    %v2235 = vpack.c.b16 %v2112, %v2109
    %v2236 = vpack.c.b16 %v2113, %v2110
    %v2237 = vpack.c.b16 %v2114, %v2111
    %v2238 = vpack.c.b16 %v2118, %v2115
    %v2239 = vpack.c.b16 %v2119, %v2116
    %v2240 = vpack.c.b16 %v2120, %v2117
    %v2241 = vpack.c.b16 %v2124, %v2121
    %v2242 = vpack.c.b16 %v2125, %v2122
    %v2243 = vpack.c.b16 %v2126, %v2123
    %v2244 = vpack.c.b16 %v2130, %v2127
    %v2245 = vpack.c.b16 %v2131, %v2128
    %v2246 = vpack.c.b16 %v2132, %v2129
    %v2247 = vpack.c.b16 %v2136, %v2133
    %v2248 = vpack.c.b16 %v2137, %v2134
    %v2249 = vpack.c.b16 %v2138, %v2135
    %v2250 = vpack.c.b16 %v2142, %v2139
    %v2251 = vpack.c.b16 %v2143, %v2140
    %v2252 = vpack.c.b16 %v2144, %v2141
    %v2253 = vpack.c.b16 %v2148, %v2145
    %v2254 = vpack.c.b16 %v2149, %v2146
    %v2255 = vpack.c.b16 %v2150, %v2147
    %v2256 = vpack.c.b16 %v2154, %v2151
    %v2257 = vpack.c.b16 %v2155, %v2152
    %v2258 = vpack.c.b16 %v2156, %v2153
    %v2259 = vpack.c.b16 %v2160, %v2157
    %v2260 = vpack.c.b16 %v2161, %v2158
    %v2261 = vpack.c.b16 %v2162, %v2159
    %v2262 = vpack.c.b16 %v2166, %v2163
    %v2263 = vpack.c.b16 %v2167, %v2164
    %v2264 = vpack.c.b16 %v2168, %v2165
    %2361 = vmatprep.subr.bf16.mxu0 %v2191
    %2362 = vmatpush1.bf16.msra.mxu0 %v2190
    %2363 = vmatprep.subr.bf16.mxu0 %v2188
    %2364 = vmatpush1.bf16.msra.mxu0 %v2187
    %2365 = vmatprep.subr.bf16.mxu0 %v2185
    %2366 = vmatpush1.bf16.msra.mxu0 %v2184
    %2367 = vmatprep.subr.bf16.mxu0 %v2182
    %2368 = vmatpush1.bf16.msra.mxu0 %v2181
    %2369 = vmatprep.subr.bf16.mxu0 %v2179
    %2370 = vmatpush1.bf16.msra.mxu0 %v2178
    %2371 = vmatprep.subr.bf16.mxu0 %v2176
    %2372 = vmatpush1.bf16.msra.mxu0 %v2175
    %2373 = vmatprep.subr.bf16.mxu0 %v2173
    %2374 = vmatpush1.bf16.msra.mxu0 %v2172
    %2375 = vmatprep.subr.bf16.mxu0 %v2170
    %2376 = vmatpush1.bf16.msra.mxu0 %v2169
    %2377 = vmatprep.subr.bf16.mxu0 %v2215
    %2378 = vmatpush2.bf16.msra.mxu0 %v2214
    %2379 = vmatprep.subr.bf16.mxu0 %v2212
    %2380 = vmatpush2.bf16.msra.mxu0 %v2211
    %2381 = vmatprep.subr.bf16.mxu0 %v2209
    %2382 = vmatpush2.bf16.msra.mxu0 %v2208
    %2383 = vmatprep.subr.bf16.mxu0 %v2206
    %2384 = vmatpush2.bf16.msra.mxu0 %v2205
    %2385 = vmatprep.subr.bf16.mxu0 %v2203
    %2386 = vmatpush2.bf16.msra.mxu0 %v2202
    %2387 = vmatprep.subr.bf16.mxu0 %v2200
    %2388 = vmatpush2.bf16.msra.mxu0 %v2199
    %2389 = vmatprep.subr.bf16.mxu0 %v2197
    %2390 = vmatpush2.bf16.msra.mxu0 %v2196
    %2391 = vmatprep.subr.bf16.mxu0 %v2194
    %2392 = vmatpush2.bf16.msra.mxu0 %v2193
    %2393 = vmatprep.mubr.bf16.mxu0 %v1701
    %2394 = vmatmul.mubr.bf16.gmra.mxu0 %v1700
    %v2395 = vpop.f32.mrf.mxu0
    %v2396 = vadd.f32 %v1837, %v2395
    %v2397 = vpop.f32.mrf.mxu0
    %v2398 = vadd.f32 %v1841, %v2397
    %v2399 = vpop.f32.mrf.mxu0
    %v2400 = vadd.f32 %v1837, %v2399
    %v2401 = vpop.f32.mrf.mxu0
    %v2402 = vadd.f32 %v1841, %v2401
    %2403 = vdwg.mxu0
    %2404 = vmatprep.subr.bf16.mxu0 %v2239
    %2405 = vmatpush1.bf16.msra.mxu0 %v2238
    %2406 = vmatprep.subr.bf16.mxu0 %v2236
    %2407 = vmatpush1.bf16.msra.mxu0 %v2235
    %2408 = vmatprep.subr.bf16.mxu0 %v2233
    %2409 = vmatpush1.bf16.msra.mxu0 %v2232
    %2410 = vmatprep.subr.bf16.mxu0 %v2230
    %2411 = vmatpush1.bf16.msra.mxu0 %v2229
    %2412 = vmatprep.subr.bf16.mxu0 %v2227
    %2413 = vmatpush1.bf16.msra.mxu0 %v2226
    %2414 = vmatprep.subr.bf16.mxu0 %v2224
    %2415 = vmatpush1.bf16.msra.mxu0 %v2223
    %2416 = vmatprep.subr.bf16.mxu0 %v2221
    %2417 = vmatpush1.bf16.msra.mxu0 %v2220
    %2418 = vmatprep.subr.bf16.mxu0 %v2218
    %2419 = vmatpush1.bf16.msra.mxu0 %v2217
    %2420 = vmatprep.subr.bf16.mxu0 %v2263
    %2421 = vmatpush2.bf16.msra.mxu0 %v2262
    %2422 = vmatprep.subr.bf16.mxu0 %v2260
    %2423 = vmatpush2.bf16.msra.mxu0 %v2259
    %2424 = vmatprep.subr.bf16.mxu0 %v2257
    %2425 = vmatpush2.bf16.msra.mxu0 %v2256
    %2426 = vmatprep.subr.bf16.mxu0 %v2254
    %2427 = vmatpush2.bf16.msra.mxu0 %v2253
    %2428 = vmatprep.subr.bf16.mxu0 %v2251
    %2429 = vmatpush2.bf16.msra.mxu0 %v2250
    %2430 = vmatprep.subr.bf16.mxu0 %v2248
    %2431 = vmatpush2.bf16.msra.mxu0 %v2247
    %2432 = vmatprep.subr.bf16.mxu0 %v2245
    %2433 = vmatpush2.bf16.msra.mxu0 %v2244
    %2434 = vmatprep.subr.bf16.mxu0 %v2242
    %2435 = vmatpush2.bf16.msra.mxu0 %v2241
    %2436 = vmatprep.mubr.bf16.mxu0 %v1703
    %2437 = vmatmul.mubr.bf16.gmra.mxu0 %v1702
    %v2438 = vpop.f32.mrf.mxu0
    %v2439 = vadd.f32 %v2396, %v2438
    %v2440 = vpop.f32.mrf.mxu0
    %v2441 = vadd.f32 %v2398, %v2440
    %v2442 = vpop.f32.mrf.mxu0
    %v2443 = vadd.f32 %v2400, %v2442
    %v2444 = vpop.f32.mrf.mxu0
    %v2445 = vadd.f32 %v2402, %v2444
    %2446 = vdwg.mxu0
    %2447 = vmatprep.subr.bf16.mxu0 0
    %2448 = vmatpush1.bf16.msra.mxu0 %v2192
    %2449 = vmatprep.subr.bf16.mxu0 0
    %2450 = vmatpush1.bf16.msra.mxu0 %v2189
    %2451 = vmatprep.subr.bf16.mxu0 0
    %2452 = vmatpush1.bf16.msra.mxu0 %v2186
    %2453 = vmatprep.subr.bf16.mxu0 0
    %2454 = vmatpush1.bf16.msra.mxu0 %v2183
    %2455 = vmatprep.subr.bf16.mxu0 0
    %2456 = vmatpush1.bf16.msra.mxu0 %v2180
    %2457 = vmatprep.subr.bf16.mxu0 0
    %2458 = vmatpush1.bf16.msra.mxu0 %v2177
    %2459 = vmatprep.subr.bf16.mxu0 0
    %2460 = vmatpush1.bf16.msra.mxu0 %v2174
    %2461 = vmatprep.subr.bf16.mxu0 0
    %2462 = vmatpush1.bf16.msra.mxu0 %v2171
    %2463 = vmatprep.subr.bf16.mxu0 0
    %2464 = vmatpush2.bf16.msra.mxu0 %v2216
    %2465 = vmatprep.subr.bf16.mxu0 0
    %2466 = vmatpush2.bf16.msra.mxu0 %v2213
    %2467 = vmatprep.subr.bf16.mxu0 0
    %2468 = vmatpush2.bf16.msra.mxu0 %v2210
    %2469 = vmatprep.subr.bf16.mxu0 0
    %2470 = vmatpush2.bf16.msra.mxu0 %v2207
    %2471 = vmatprep.subr.bf16.mxu0 0
    %2472 = vmatpush2.bf16.msra.mxu0 %v2204
    %2473 = vmatprep.subr.bf16.mxu0 0
    %2474 = vmatpush2.bf16.msra.mxu0 %v2201
    %2475 = vmatprep.subr.bf16.mxu0 0
    %2476 = vmatpush2.bf16.msra.mxu0 %v2198
    %2477 = vmatprep.subr.bf16.mxu0 0
    %2478 = vmatpush2.bf16.msra.mxu0 %v2195
    %2479 = vmatprep.mubr.bf16.mxu0 %v1701
    %2480 = vmatmul.mubr.bf16.gmra.mxu0 %v1700
    %v2481 = vpop.f32.mrf.mxu0
    %v2482 = vadd.f32 %v1845, %v2481
    %v2483 = vpop.f32.mrf.mxu0
    %v2484 = vpop.f32.mrf.mxu0
    %v2485 = vadd.f32 %v1845, %v2484
    %v2486 = vpop.f32.mrf.mxu0
    %2487 = vdwg.mxu0
    %2488 = vmatprep.subr.bf16.mxu0 0
    %2489 = vmatpush1.bf16.msra.mxu0 %v2240
    %2490 = vmatprep.subr.bf16.mxu0 0
    %2491 = vmatpush1.bf16.msra.mxu0 %v2237
    %2492 = vmatprep.subr.bf16.mxu0 0
    %2493 = vmatpush1.bf16.msra.mxu0 %v2234
    %2494 = vmatprep.subr.bf16.mxu0 0
    %2495 = vmatpush1.bf16.msra.mxu0 %v2231
    %2496 = vmatprep.subr.bf16.mxu0 0
    %2497 = vmatpush1.bf16.msra.mxu0 %v2228
    %2498 = vmatprep.subr.bf16.mxu0 0
    %2499 = vmatpush1.bf16.msra.mxu0 %v2225
    %2500 = vmatprep.subr.bf16.mxu0 0
    %2501 = vmatpush1.bf16.msra.mxu0 %v2222
    %2502 = vmatprep.subr.bf16.mxu0 0
    %2503 = vmatpush1.bf16.msra.mxu0 %v2219
    %2504 = vmatprep.subr.bf16.mxu0 0
    %2505 = vmatpush2.bf16.msra.mxu0 %v2264
    %2506 = vmatprep.subr.bf16.mxu0 0
    %2507 = vmatpush2.bf16.msra.mxu0 %v2261
    %2508 = vmatprep.subr.bf16.mxu0 0
    %2509 = vmatpush2.bf16.msra.mxu0 %v2258
    %2510 = vmatprep.subr.bf16.mxu0 0
    %2511 = vmatpush2.bf16.msra.mxu0 %v2255
    %2512 = vmatprep.subr.bf16.mxu0 0
    %2513 = vmatpush2.bf16.msra.mxu0 %v2252
    %2514 = vmatprep.subr.bf16.mxu0 0
    %2515 = vmatpush2.bf16.msra.mxu0 %v2249
    %2516 = vmatprep.subr.bf16.mxu0 0
    %2517 = vmatpush2.bf16.msra.mxu0 %v2246
    %2518 = vmatprep.subr.bf16.mxu0 0
    %2519 = vmatpush2.bf16.msra.mxu0 %v2243
    %2520 = vmatprep.mubr.bf16.mxu0 %v1703
    %2521 = vmatmul.mubr.bf16.gmra.mxu0 %v1702
    %v2522 = vpop.f32.mrf.mxu0
    %v2523 = vadd.f32 %v2482, %v2522
    %v2524 = vpop.f32.mrf.mxu0
    %v2525 = vpop.f32.mrf.mxu0
    %v2526 = vadd.f32 %v2485, %v2525
    %v2527 = vpop.f32.mrf.mxu0
    %2528 = vdwg.mxu0
    %2529 = vst [vmem:[%s10] sm:$0xff] %v2439
    %2530 = vst [vmem:[%s10 + $0x8] sm:$0xff] %v2441
    %2531 = vst [vmem:[%s10 + $0x10] sm:$0xff] %v2523
    %2532 = vst [vmem:[%s10 + $0x18] sm:$0xff] %v2443
    %2533 = vst [vmem:[%s10 + $0x20] sm:$0xff] %v2445
    %2534 = vst [vmem:[%s10 + $0x28] sm:$0xff] %v2526
    %2535 = vst [vmem:[%s11] sm:$0xff] %v1369
    %2536 = vst [vmem:[%s11 + $0x8] sm:$0xff] %v1371
    %2537 = vst [vmem:[%s11 + $0x10] sm:$0xff] %v1373
    %2538 = vst [vmem:[%s11 + $0x18] sm:$0xff] %v1375
    // Predicated region
    $region58: #{vae_forward.1} parent=1 // pred_check
      _
    $region59: #{vae_forward.1} parent=1 // pred_check_branch
      %2540 = sbr.rel (0) target = $region61
    $region60: #{vae_forward.1} parent=1 // pred_region
      _
    $region61: #{vae_forward.1} parent=1 // pred_fallthru
      _
    // Predicated region
    $region62: #{vae_forward.1} parent=1 // pred_check
      _
    $region63: #{vae_forward.1} parent=1 // pred_check_branch
      %2542 = sbr.rel (0) target = $region65
    $region64: #{vae_forward.1} parent=1 // pred_region
      _
    $region65: #{vae_forward.1} parent=1 // pred_fallthru
      _
    // Predicated region
    $region66: #{vae_forward.1} parent=1 // pred_check
      _
    $region67: #{vae_forward.1} parent=1 // pred_check_branch
      %2544 = sbr.rel (0) target = $region69
    $region68: #{vae_forward.1} parent=1 // pred_region
      _
    $region69: #{vae_forward.1} parent=1 // pred_fallthru
      _
    // Predicated region
    $region70: #{vae_forward.1} parent=1 // pred_check
      _
    $region71: #{vae_forward.1} parent=1 // pred_check_branch
      %2546 = sbr.rel (0) target = $region73
    $region72: #{vae_forward.1} parent=1 // pred_region
      _
    $region73: #{vae_forward.1} parent=1 // pred_fallthru
      _
    %2547 = vsyncpa [#allocation3], 1
    %2548 = vsyncpa [#allocation5], 1
    %2549 = vsyncpa [#allocation8], 1

</llo_original>
